<compile_context>
chip_gen: v7x
topology: tpu7x:2x2x1
jax: 0.10.0
libtpu: 0.0.40
codegen_flags: <defaults>
</compile_context>

<pallas_src>
import functools
import math

import numpy as np
import jax
import jax.numpy as jnp
from jax.experimental import pallas as pl
from jax.experimental.pallas import tpu as pltpu


def _round_up(n, m):
    return ((n + m - 1) // m) * m


def _pick_block(n, unit, cap):
    """Largest multiple of `unit` that divides n, is <= cap, and (when
    possible) leaves >= 2 grid steps so v7x can shard a 'parallel' axis across
    its 2 TensorCores.  `n` must already be a multiple of `unit`."""
    assert n % unit == 0
    limit = min(cap, n // 2) if n >= 2 * unit else min(cap, n)
    d = (limit // unit) * unit
    while d > unit and n % d != 0:
        d -= unit
    return max(d, unit)


def _mxu_width():
    """Native MXU tile width: 256 on v6e/v7x, 128 on older gens (and as a
    safe default if the device kind cannot be determined)."""
    try:
        kind = jax.devices()[0].device_kind.lower()
    except Exception:
        return 128
    return 256 if ("v6" in kind or "v7" in kind) else 128


# ----------------------------------------------------------------------------
# Kernel 1: Fourier-space complex MAC over the 3x3 shift grid.
#   out[f, m] = sum_{a,b in {-1,0,1}} c_ab * x[(h(m)+a) mod H-group, (f+b) mod Wf]
# Input layout per real/imag component: (Wf+2, M)
#   axis 0 : Wf wrap-haloed by 1 on each side -> the 3 Wf-shifts are static
#            sublane windows of the single loaded plane (no extra HBM traffic)
#   axis 1 : M = B*C*H on the lane axis (lane-dense); H is the fastest axis of
#            M, so the +/-1 H-shift is a lane roll + per-group boundary select
#            done in-kernel (no materialized H-rolled copies in HBM).
# Output is packed (2, Wf, M) = (real, imag).
# ----------------------------------------------------------------------------
def _fourier_mix_kernel(cr_ref, ci_ref, xr_ref, xi_ref, o_ref, *, H):
    wf = o_ref.shape[1]
    bm = o_ref.shape[2]

    # Hoisted single load of each haloed plane (review: no per-(ia,ib) reloads).
    xr = xr_ref[...]                       # (Wf+2, bm)
    xi = xi_ref[...]

    # Lane index inside each H-group (bm is a multiple of H and every block
    # starts at a group boundary, so local index == global index mod H).
    lane = jax.lax.broadcasted_iota(jnp.int32, (1, bm), 1)
    h_loc = lane % H
    top = h_loc == (H - 1)                 # wrap lanes for a = +1
    bot = h_loc == 0                       # wrap lanes for a = -1

    def h_shift(x, a):
        # Group-wise roll along H: out[g*H + h] = x[g*H + (h + a) % H]
        if a == 0:
            return x
        interior = pltpu.roll(x, shift=(-a) % bm, axis=1)            # x[m + a]
        wrapped = pltpu.roll(x, shift=(a * (H - 1)) % bm, axis=1)     # x[m + a - a*H]
        return jnp.where(top if a > 0 else bot, wrapped, interior)

    acc_r = jnp.zeros((wf, bm), jnp.float32)
    acc_i = jnp.zeros((wf, bm), jnp.float32)
    for ia, a in enumerate((-1, 0, 1)):    # H-shift (static unroll, lane roll)
        xra = h_shift(xr, a)
        xia = h_shift(xi, a)
        for ib in range(3):                # Wf-shift = sublane window slice
            s = 3 * ia + ib
            cr = cr_ref[s]                 # SMEM scalars
            ci = ci_ref[s]
            wr = xra[ib:ib + wf, :]
            wi = xia[ib:ib + wf, :]
            acc_r = acc_r + (cr * wr - ci * wi)
            acc_i = acc_i + (cr * wi + ci * wr)
    o_ref[0] = acc_r
    o_ref[1] = acc_i


def fourier_mix_pallas(coeff_r, coeff_i, xr_k, xi_k, H):
    wf_h, Mp = xr_k.shape                  # wf_h = Wf + 2, Mp padded multiple of lcm(128,H)
    wf = wf_h - 2
    unit = (128 * H) // math.gcd(128, H)   # blocks hold whole H-groups, lane-dense
    bm = _pick_block(Mp, unit, 8192)
    grid = (Mp // bm,)
    kernel = functools.partial(_fourier_mix_kernel, H=H)
    return pl.pallas_call(
        kernel,
        out_shape=jax.ShapeDtypeStruct((2, wf, Mp), jnp.float32),
        grid=grid,
        in_specs=[
            pl.BlockSpec(memory_space=pltpu.MemorySpace.SMEM),   # coeff_r (9,)
            pl.BlockSpec(memory_space=pltpu.MemorySpace.SMEM),   # coeff_i (9,)
            pl.BlockSpec((wf_h, bm), lambda m: (0, m)),          # xr (Wf+2, Mp)
            pl.BlockSpec((wf_h, bm), lambda m: (0, m)),          # xi (Wf+2, Mp)
        ],
        out_specs=pl.BlockSpec((2, wf, bm), lambda m: (0, 0, m)),
        compiler_params=pltpu.CompilerParams(
            dimension_semantics=("parallel",),
            vmem_limit_bytes=32 * 1024 * 1024),
    )(coeff_r, coeff_i, xr_k, xi_k)


# ----------------------------------------------------------------------------
# Kernel 2: MLP head  relu(x @ W1 + b1) @ W2 + b2  on packed lane-dense slabs.
# The wrapper packs P rows side-by-side (feature dim Dp = MXU width) and
# expands the weights to block-diagonal, so the MXU sees K = N = Dp and the
# output last dim is a full lane multiple (no masked stores on any path).
# Weight/bias blocks use constant index maps and stay VMEM-resident.
# ----------------------------------------------------------------------------
def _mlp_kernel(x_ref, w1_ref, b1_ref, w2_ref, b2_ref, o_ref):
    h = jnp.dot(x_ref[...], w1_ref[...],
                preferred_element_type=jnp.float32) + b1_ref[...]
    h = jnp.maximum(h, 0.0)
    o_ref[...] = jnp.dot(h, w2_ref[...],
                         preferred_element_type=jnp.float32) + b2_ref[...]


def mlp_pallas(x2d, w1, b1, w2, b2):
    Mp, Dp = x2d.shape
    bm = _pick_block(Mp, 8, 2048)
    grid = (Mp // bm,)
    return pl.pallas_call(
        _mlp_kernel,
        out_shape=jax.ShapeDtypeStruct((Mp, Dp), jnp.float32),
        grid=grid,
        in_specs=[
            pl.BlockSpec((bm, Dp), lambda m: (m, 0)),
            pl.BlockSpec((Dp, Dp), lambda m: (0, 0)),
            pl.BlockSpec((1, Dp), lambda m: (0, 0)),
            pl.BlockSpec((Dp, Dp), lambda m: (0, 0)),
            pl.BlockSpec((1, Dp), lambda m: (0, 0)),
        ],
        out_specs=pl.BlockSpec((bm, Dp), lambda m: (m, 0)),
        compiler_params=pltpu.CompilerParams(
            dimension_semantics=("parallel",),
            vmem_limit_bytes=32 * 1024 * 1024),
    )(x2d, w1, b1, w2, b2)


# ----------------------------------------------------------------------------
# FNO2d forward
# ----------------------------------------------------------------------------
@functools.partial(jax.jit, static_argnums=(6,))
def fno2d_forward(x, fweights, fc1_w, fc1_b, fc2_w, fc2_b, width):
    B, C, H, W = x.shape
    assert W == width, "Linear layers act on last dim -> last dim must equal width"

    scale = float((2.0 * np.pi) ** 0.5)
    freqs = np.fft.fftfreq(W).astype(np.float32)   # grid[i, j] = (freqs[i], freqs[j])
    k1 = [int(freqs[i] * scale) for i in range(width)]   # int() truncates toward 0
    k2 = [int(freqs[j] * scale) for j in range(width)]
    assert all(-1 <= k <= 1 for k in k1 + k2)      # always true for fftfreq * sqrt(2*pi)

    # TODO(synk): rfft2/irfft2 have no Pallas primitive; computed with jnp.fft.
    x_ft = jnp.fft.rfft2(x)                        # (B, C, H, Wf) complex64
    Wf = x_ft.shape[-1]
    M = B * C * H

    # Group the width*width (i, j) terms by their (static) roll-shift pair
    # (a, b) = (k1[i], k2[j]); summed complex coefficient per pair,
    # indexed s = 3*(a+1) + (b+1).
    sel = np.zeros((9, width, width), np.float32)
    for i in range(width):
        for j in range(width):
            sel[3 * (k1[i] + 1) + (k2[j] + 1), i, j] = 1.0
    sel = jnp.asarray(sel)
    coeff_r = jnp.einsum("sij,ij->s", sel, fweights[..., 0])
    coeff_i = jnp.einsum("sij,ij->s", sel, fweights[..., 1])

    unit_m = (128 * H) // math.gcd(128, H)         # lane blocks hold whole H-groups
    M_pad = _round_up(M, unit_m)

    def prep(t):                                   # (B, C, H, Wf) real component
        # wrap halo along Wf -> the 3 Wf-shifts become in-kernel sublane windows
        t = jnp.concatenate([t[..., -1:], t, t[..., :1]], axis=-1)   # (B,C,H,Wf+2)
        # lane-dense layout: (Wf+2, B*C*H); H is the fastest axis of the lane dim
        t = jnp.transpose(t, (3, 0, 1, 2)).reshape(Wf + 2, M)
        if M_pad != M:
            t = jnp.pad(t, ((0, 0), (0, M_pad - M)))
        return t

    out_packed = fourier_mix_pallas(
        coeff_r, coeff_i, prep(jnp.real(x_ft)), prep(jnp.imag(x_ft)), H)

    out_r = jnp.transpose(out_packed[0, :, :M].reshape(Wf, B, C, H), (1, 2, 3, 0))
    out_i = jnp.transpose(out_packed[1, :, :M].reshape(Wf, B, C, H), (1, 2, 3, 0))
    out_ft = jax.lax.complex(out_r, out_i)         # (B, C, H, Wf)

    y = jnp.fft.irfft2(out_ft)                     # (B, C, H, W), float32

    # MLP head: pack P rows side-by-side into a lane-dense feature dim Dp
    # (gen-gated MXU width), block-diagonal weights == P independent fc's.
    mxu = _mxu_width()
    Wp = W if mxu % W == 0 else _round_up(W, 128)  # zero-pad awkward widths
    Dp = max(mxu, Wp)
    P = Dp // Wp

    def pack_w(w):                                 # torch Linear: y = x @ w.T + b
        wt = jnp.pad(jnp.transpose(w), ((0, Wp - W), (0, Wp - W)))
        return jnp.kron(jnp.eye(P, dtype=jnp.float32), wt)          # (Dp, Dp)

    def pack_b(b):
        return jnp.tile(jnp.pad(b, (0, Wp - W)), P).reshape(1, Dp)

    y_flat = y.reshape(M, W)
    if Wp != W:
        y_flat = jnp.pad(y_flat, ((0, 0), (0, Wp - W)))
    M_rows = _round_up(M, P * 8)                   # rows multiple of P * sublane(8)
    if M_rows != M:
        y_flat = jnp.pad(y_flat, ((0, M_rows - M), (0, 0)))
    y_p = y_flat.reshape(M_rows // P, Dp)          # contiguous row packing

    out = mlp_pallas(y_p, pack_w(fc1_w), pack_b(fc1_b), pack_w(fc2_w), pack_b(fc2_b))
    out = out.reshape(M_rows, Wp)[:M, :W]
    return out.reshape(B, C, H, W)


# ----------------------------------------------------------------------------
# Pure-JAX reference (literal translation of the PyTorch double loop)
# ----------------------------------------------------------------------------
def fno2d_reference(x, fweights, fc1_w, fc1_b, fc2_w, fc2_b, width):
    scale = float((2.0 * np.pi) ** 0.5)
    W = x.shape[-1]
    freqs = np.fft.fftfreq(W).astype(np.float32)
    x_ft = jnp.fft.rfft2(x)
    out_ft = jnp.zeros_like(x_ft)
    for i in range(width):
        for j in range(width):
            a = int(freqs[i] * scale)
            b = int(freqs[j] * scale)
            cw = fweights[i, j, 0] + 1j * fweights[i, j, 1]
            out_ft = out_ft + cw * jnp.roll(x_ft, shift=(-a, -b), axis=(-2, -1))
    y = jnp.fft.irfft2(out_ft)
    h = jnp.maximum(jnp.einsum("bchw,ow->bcho", y, fc1_w) + fc1_b, 0.0)
    return jnp.einsum("bchw,ow->bcho", h, fc2_w) + fc2_b


if __name__ == "__main__":
    width = 16   # last spatial dim == width (required: fc layers act on last dim)
    modes = 8    # stored but unused in the PyTorch forward pass
    B, C, H = 2, 4, 16

    key = jax.random.PRNGKey(0)
    kx, kw, ka, kb, kc, kd = jax.random.split(key, 6)

    x = jax.random.normal(kx, (B, C, H, width), jnp.float32)
    fweights = jax.random.normal(kw, (width, width, 2), jnp.float32)
    bound = 1.0 / np.sqrt(width)
    fc1_w = jax.random.uniform(ka, (width, width), jnp.float32, -bound, bound)
    fc1_b = jax.random.uniform(kb, (width,), jnp.float32, -bound, bound)
    fc2_w = jax.random.uniform(kc, (width, width), jnp.float32, -bound, bound)
    fc2_b = jax.random.uniform(kd, (width,), jnp.float32, -bound, bound)

    out = fno2d_forward(x, fweights, fc1_w, fc1_b, fc2_w, fc2_b, width)
    out = jax.block_until_ready(out)
    assert out.shape == (B, C, H, width)
    assert out.dtype == jnp.float32

    ref = jax.block_until_ready(
        fno2d_reference(x, fweights, fc1_w, fc1_b, fc2_w, fc2_b, width))
    np.testing.assert_allclose(np.asarray(out), np.asarray(ref),
                               rtol=1e-3, atol=1e-3)

    print("KERNEL_OK")
</pallas_src>

<mosaic_0001>
module attributes {stable_mosaic.version = 11 : i64} {
  func.func @_fourier_mix_kernel(%arg0: i32, %arg1: memref<9xf32, #tpu.memory_space<smem>>, %arg2: memref<9xf32, #tpu.memory_space<smem>>, %arg3: memref<11x128xf32, #tpu.memory_space<vmem>>, %arg4: memref<11x128xf32, #tpu.memory_space<vmem>>, %arg5: memref<2x9x128xf32, #tpu.memory_space<vmem>>) attributes {dimension_semantics = [#tpu.dimension_semantics<parallel>], iteration_bounds = array<i64: 1>, scalar_prefetch = 0 : i64, scratch_operands = 0 : i64, tpu.core_type = #tpu.core_type<tc>, window_params = [{transform_indices = @transform_0, window_bounds = array<i64: 9>}, {transform_indices = @transform_1, window_bounds = array<i64: 9>}, {transform_indices = @transform_2, window_bounds = array<i64: 11, 128>}, {transform_indices = @transform_3, window_bounds = array<i64: 11, 128>}, {transform_indices = @transform_4, window_bounds = array<i64: 2, 9, 128>}]} {
    %c0 = arith.constant 0 : index
    %c0_0 = arith.constant 0 : index
    %0 = vector.load %arg3[%c0, %c0_0] : memref<11x128xf32, #tpu.memory_space<vmem>>, vector<11x128xf32>
    %c0_1 = arith.constant 0 : index
    %c0_2 = arith.constant 0 : index
    %1 = vector.load %arg4[%c0_1, %c0_2] : memref<11x128xf32, #tpu.memory_space<vmem>>, vector<11x128xf32>
    %2 = tpu.iota {dimensions = array<i32: 1>} : vector<1x128xi32>
    %c16_i32 = arith.constant 16 : i32
    %c0_i32 = arith.constant 0 : i32
    %3 = arith.cmpi eq, %c16_i32, %c0_i32 : i32
    %c1_i32 = arith.constant 1 : i32
    %4 = arith.select %3, %c1_i32, %c16_i32 : i32
    %5 = vector.broadcast %4 : i32 to vector<1x128xi32>
    %6 = arith.remsi %2, %5 : vector<1x128xi32>
    %c0_i32_3 = arith.constant 0 : i32
    %7 = vector.broadcast %c0_i32_3 : i32 to vector<1x128xi32>
    %8 = arith.cmpi ne, %6, %7 : vector<1x128xi32>
    %c0_i32_4 = arith.constant 0 : i32
    %9 = vector.broadcast %c0_i32_4 : i32 to vector<1x128xi32>
    %10 = arith.cmpi slt, %6, %9 : vector<1x128xi32>
    %c0_i32_5 = arith.constant 0 : i32
    %11 = arith.cmpi slt, %4, %c0_i32_5 : i32
    %12 = vector.broadcast %11 : i1 to vector<1x128xi1>
    %13 = vector.broadcast %12 : vector<1x128xi1> to vector<1x128xi1>
    %14 = arith.xori %10, %13 : vector<1x128xi1>
    %15 = arith.andi %14, %8 : vector<1x128xi1>
    %16 = vector.broadcast %4 : i32 to vector<1x128xi32>
    %17 = arith.addi %6, %16 : vector<1x128xi32>
    %18 = arith.select %15, %17, %6 : vector<1x128xi1>, vector<1x128xi32>
    %c15_i32 = arith.constant 15 : i32
    %19 = vector.broadcast %c15_i32 : i32 to vector<1x128xi32>
    %20 = arith.cmpi eq, %18, %19 : vector<1x128xi32>
    %c0_i32_6 = arith.constant 0 : i32
    %21 = vector.broadcast %c0_i32_6 : i32 to vector<1x128xi32>
    %22 = arith.cmpi eq, %18, %21 : vector<1x128xi32>
    %cst = arith.constant 0.000000e+00 : f32
    %23 = vector.broadcast %cst : f32 to vector<9x128xf32>
    %cst_7 = arith.constant 0.000000e+00 : f32
    %24 = vector.broadcast %cst_7 : f32 to vector<9x128xf32>
    %c1_i32_8 = arith.constant 1 : i32
    %25 = tpu.dynamic_rotate %0 by %c1_i32_8 dim 1 : vector<11x128xf32>, i32 -> vector<11x128xf32>
    %c113_i32 = arith.constant 113 : i32
    %26 = tpu.dynamic_rotate %0 by %c113_i32 dim 1 : vector<11x128xf32>, i32 -> vector<11x128xf32>
    %27 = vector.shape_cast %22 : vector<1x128xi1> to vector<1x128xi1>
    %28 = vector.broadcast %27 : vector<1x128xi1> to vector<11x128xi1>
    %29 = arith.select %28, %26, %25 : vector<11x128xi1>, vector<11x128xf32>
    %c1_i32_9 = arith.constant 1 : i32
    %30 = tpu.dynamic_rotate %1 by %c1_i32_9 dim 1 : vector<11x128xf32>, i32 -> vector<11x128xf32>
    %c113_i32_10 = arith.constant 113 : i32
    %31 = tpu.dynamic_rotate %1 by %c113_i32_10 dim 1 : vector<11x128xf32>, i32 -> vector<11x128xf32>
    %32 = vector.shape_cast %22 : vector<1x128xi1> to vector<1x128xi1>
    %33 = vector.broadcast %32 : vector<1x128xi1> to vector<11x128xi1>
    %34 = arith.select %33, %31, %30 : vector<11x128xi1>, vector<11x128xf32>
    %c0_11 = arith.constant 0 : index
    %35 = memref.load %arg1[%c0_11] : memref<9xf32, #tpu.memory_space<smem>>
    %c0_12 = arith.constant 0 : index
    %36 = memref.load %arg2[%c0_12] : memref<9xf32, #tpu.memory_space<smem>>
    %37 = vector.extract_strided_slice %29 {offsets = [0, 0], sizes = [9, 128], strides = [1, 1]} : vector<11x128xf32> to vector<9x128xf32>
    %38 = vector.extract_strided_slice %34 {offsets = [0, 0], sizes = [9, 128], strides = [1, 1]} : vector<11x128xf32> to vector<9x128xf32>
    %39 = vector.broadcast %35 : f32 to vector<9x128xf32>
    %40 = arith.mulf %39, %37 : vector<9x128xf32>
    %41 = vector.broadcast %36 : f32 to vector<9x128xf32>
    %42 = arith.mulf %41, %38 : vector<9x128xf32>
    %43 = arith.subf %40, %42 : vector<9x128xf32>
    %44 = arith.addf %23, %43 : vector<9x128xf32>
    %45 = vector.broadcast %35 : f32 to vector<9x128xf32>
    %46 = arith.mulf %45, %38 : vector<9x128xf32>
    %47 = vector.broadcast %36 : f32 to vector<9x128xf32>
    %48 = arith.mulf %47, %37 : vector<9x128xf32>
    %49 = arith.addf %46, %48 : vector<9x128xf32>
    %50 = arith.addf %24, %49 : vector<9x128xf32>
    %c1 = arith.constant 1 : index
    %51 = memref.load %arg1[%c1] : memref<9xf32, #tpu.memory_space<smem>>
    %c1_13 = arith.constant 1 : index
    %52 = memref.load %arg2[%c1_13] : memref<9xf32, #tpu.memory_space<smem>>
    %53 = vector.extract_strided_slice %29 {offsets = [1, 0], sizes = [9, 128], strides = [1, 1]} : vector<11x128xf32> to vector<9x128xf32>
    %54 = vector.extract_strided_slice %34 {offsets = [1, 0], sizes = [9, 128], strides = [1, 1]} : vector<11x128xf32> to vector<9x128xf32>
    %55 = vector.broadcast %51 : f32 to vector<9x128xf32>
    %56 = arith.mulf %55, %53 : vector<9x128xf32>
    %57 = vector.broadcast %52 : f32 to vector<9x128xf32>
    %58 = arith.mulf %57, %54 : vector<9x128xf32>
    %59 = arith.subf %56, %58 : vector<9x128xf32>
    %60 = arith.addf %44, %59 : vector<9x128xf32>
    %61 = vector.broadcast %51 : f32 to vector<9x128xf32>
    %62 = arith.mulf %61, %54 : vector<9x128xf32>
    %63 = vector.broadcast %52 : f32 to vector<9x128xf32>
    %64 = arith.mulf %63, %53 : vector<9x128xf32>
    %65 = arith.addf %62, %64 : vector<9x128xf32>
    %66 = arith.addf %50, %65 : vector<9x128xf32>
    %c2 = arith.constant 2 : index
    %67 = memref.load %arg1[%c2] : memref<9xf32, #tpu.memory_space<smem>>
    %c2_14 = arith.constant 2 : index
    %68 = memref.load %arg2[%c2_14] : memref<9xf32, #tpu.memory_space<smem>>
    %69 = vector.extract_strided_slice %29 {offsets = [2, 0], sizes = [9, 128], strides = [1, 1]} : vector<11x128xf32> to vector<9x128xf32>
    %70 = vector.extract_strided_slice %34 {offsets = [2, 0], sizes = [9, 128], strides = [1, 1]} : vector<11x128xf32> to vector<9x128xf32>
    %71 = vector.broadcast %67 : f32 to vector<9x128xf32>
    %72 = arith.mulf %71, %69 : vector<9x128xf32>
    %73 = vector.broadcast %68 : f32 to vector<9x128xf32>
    %74 = arith.mulf %73, %70 : vector<9x128xf32>
    %75 = arith.subf %72, %74 : vector<9x128xf32>
    %76 = arith.addf %60, %75 : vector<9x128xf32>
    %77 = vector.broadcast %67 : f32 to vector<9x128xf32>
    %78 = arith.mulf %77, %70 : vector<9x128xf32>
    %79 = vector.broadcast %68 : f32 to vector<9x128xf32>
    %80 = arith.mulf %79, %69 : vector<9x128xf32>
    %81 = arith.addf %78, %80 : vector<9x128xf32>
    %82 = arith.addf %66, %81 : vector<9x128xf32>
    %c3 = arith.constant 3 : index
    %83 = memref.load %arg1[%c3] : memref<9xf32, #tpu.memory_space<smem>>
    %c3_15 = arith.constant 3 : index
    %84 = memref.load %arg2[%c3_15] : memref<9xf32, #tpu.memory_space<smem>>
    %85 = vector.extract_strided_slice %0 {offsets = [0, 0], sizes = [9, 128], strides = [1, 1]} : vector<11x128xf32> to vector<9x128xf32>
    %86 = vector.extract_strided_slice %1 {offsets = [0, 0], sizes = [9, 128], strides = [1, 1]} : vector<11x128xf32> to vector<9x128xf32>
    %87 = vector.broadcast %83 : f32 to vector<9x128xf32>
    %88 = arith.mulf %87, %85 : vector<9x128xf32>
    %89 = vector.broadcast %84 : f32 to vector<9x128xf32>
    %90 = arith.mulf %89, %86 : vector<9x128xf32>
    %91 = arith.subf %88, %90 : vector<9x128xf32>
    %92 = arith.addf %76, %91 : vector<9x128xf32>
    %93 = vector.broadcast %83 : f32 to vector<9x128xf32>
    %94 = arith.mulf %93, %86 : vector<9x128xf32>
    %95 = vector.broadcast %84 : f32 to vector<9x128xf32>
    %96 = arith.mulf %95, %85 : vector<9x128xf32>
    %97 = arith.addf %94, %96 : vector<9x128xf32>
    %98 = arith.addf %82, %97 : vector<9x128xf32>
    %c4 = arith.constant 4 : index
    %99 = memref.load %arg1[%c4] : memref<9xf32, #tpu.memory_space<smem>>
    %c4_16 = arith.constant 4 : index
    %100 = memref.load %arg2[%c4_16] : memref<9xf32, #tpu.memory_space<smem>>
    %101 = vector.extract_strided_slice %0 {offsets = [1, 0], sizes = [9, 128], strides = [1, 1]} : vector<11x128xf32> to vector<9x128xf32>
    %102 = vector.extract_strided_slice %1 {offsets = [1, 0], sizes = [9, 128], strides = [1, 1]} : vector<11x128xf32> to vector<9x128xf32>
    %103 = vector.broadcast %99 : f32 to vector<9x128xf32>
    %104 = arith.mulf %103, %101 : vector<9x128xf32>
    %105 = vector.broadcast %100 : f32 to vector<9x128xf32>
    %106 = arith.mulf %105, %102 : vector<9x128xf32>
    %107 = arith.subf %104, %106 : vector<9x128xf32>
    %108 = arith.addf %92, %107 : vector<9x128xf32>
    %109 = vector.broadcast %99 : f32 to vector<9x128xf32>
    %110 = arith.mulf %109, %102 : vector<9x128xf32>
    %111 = vector.broadcast %100 : f32 to vector<9x128xf32>
    %112 = arith.mulf %111, %101 : vector<9x128xf32>
    %113 = arith.addf %110, %112 : vector<9x128xf32>
    %114 = arith.addf %98, %113 : vector<9x128xf32>
    %c5 = arith.constant 5 : index
    %115 = memref.load %arg1[%c5] : memref<9xf32, #tpu.memory_space<smem>>
    %c5_17 = arith.constant 5 : index
    %116 = memref.load %arg2[%c5_17] : memref<9xf32, #tpu.memory_space<smem>>
    %117 = vector.extract_strided_slice %0 {offsets = [2, 0], sizes = [9, 128], strides = [1, 1]} : vector<11x128xf32> to vector<9x128xf32>
    %118 = vector.extract_strided_slice %1 {offsets = [2, 0], sizes = [9, 128], strides = [1, 1]} : vector<11x128xf32> to vector<9x128xf32>
    %119 = vector.broadcast %115 : f32 to vector<9x128xf32>
    %120 = arith.mulf %119, %117 : vector<9x128xf32>
    %121 = vector.broadcast %116 : f32 to vector<9x128xf32>
    %122 = arith.mulf %121, %118 : vector<9x128xf32>
    %123 = arith.subf %120, %122 : vector<9x128xf32>
    %124 = arith.addf %108, %123 : vector<9x128xf32>
    %125 = vector.broadcast %115 : f32 to vector<9x128xf32>
    %126 = arith.mulf %125, %118 : vector<9x128xf32>
    %127 = vector.broadcast %116 : f32 to vector<9x128xf32>
    %128 = arith.mulf %127, %117 : vector<9x128xf32>
    %129 = arith.addf %126, %128 : vector<9x128xf32>
    %130 = arith.addf %114, %129 : vector<9x128xf32>
    %c127_i32 = arith.constant 127 : i32
    %131 = tpu.dynamic_rotate %0 by %c127_i32 dim 1 : vector<11x128xf32>, i32 -> vector<11x128xf32>
    %c15_i32_18 = arith.constant 15 : i32
    %132 = tpu.dynamic_rotate %0 by %c15_i32_18 dim 1 : vector<11x128xf32>, i32 -> vector<11x128xf32>
    %133 = vector.shape_cast %20 : vector<1x128xi1> to vector<1x128xi1>
    %134 = vector.broadcast %133 : vector<1x128xi1> to vector<11x128xi1>
    %135 = arith.select %134, %132, %131 : vector<11x128xi1>, vector<11x128xf32>
    %c127_i32_19 = arith.constant 127 : i32
    %136 = tpu.dynamic_rotate %1 by %c127_i32_19 dim 1 : vector<11x128xf32>, i32 -> vector<11x128xf32>
    %c15_i32_20 = arith.constant 15 : i32
    %137 = tpu.dynamic_rotate %1 by %c15_i32_20 dim 1 : vector<11x128xf32>, i32 -> vector<11x128xf32>
    %138 = vector.shape_cast %20 : vector<1x128xi1> to vector<1x128xi1>
    %139 = vector.broadcast %138 : vector<1x128xi1> to vector<11x128xi1>
    %140 = arith.select %139, %137, %136 : vector<11x128xi1>, vector<11x128xf32>
    %c6 = arith.constant 6 : index
    %141 = memref.load %arg1[%c6] : memref<9xf32, #tpu.memory_space<smem>>
    %c6_21 = arith.constant 6 : index
    %142 = memref.load %arg2[%c6_21] : memref<9xf32, #tpu.memory_space<smem>>
    %143 = vector.extract_strided_slice %135 {offsets = [0, 0], sizes = [9, 128], strides = [1, 1]} : vector<11x128xf32> to vector<9x128xf32>
    %144 = vector.extract_strided_slice %140 {offsets = [0, 0], sizes = [9, 128], strides = [1, 1]} : vector<11x128xf32> to vector<9x128xf32>
    %145 = vector.broadcast %141 : f32 to vector<9x128xf32>
    %146 = arith.mulf %145, %143 : vector<9x128xf32>
    %147 = vector.broadcast %142 : f32 to vector<9x128xf32>
    %148 = arith.mulf %147, %144 : vector<9x128xf32>
    %149 = arith.subf %146, %148 : vector<9x128xf32>
    %150 = arith.addf %124, %149 : vector<9x128xf32>
    %151 = vector.broadcast %141 : f32 to vector<9x128xf32>
    %152 = arith.mulf %151, %144 : vector<9x128xf32>
    %153 = vector.broadcast %142 : f32 to vector<9x128xf32>
    %154 = arith.mulf %153, %143 : vector<9x128xf32>
    %155 = arith.addf %152, %154 : vector<9x128xf32>
    %156 = arith.addf %130, %155 : vector<9x128xf32>
    %c7 = arith.constant 7 : index
    %157 = memref.load %arg1[%c7] : memref<9xf32, #tpu.memory_space<smem>>
    %c7_22 = arith.constant 7 : index
    %158 = memref.load %arg2[%c7_22] : memref<9xf32, #tpu.memory_space<smem>>
    %159 = vector.extract_strided_slice %135 {offsets = [1, 0], sizes = [9, 128], strides = [1, 1]} : vector<11x128xf32> to vector<9x128xf32>
    %160 = vector.extract_strided_slice %140 {offsets = [1, 0], sizes = [9, 128], strides = [1, 1]} : vector<11x128xf32> to vector<9x128xf32>
    %161 = vector.broadcast %157 : f32 to vector<9x128xf32>
    %162 = arith.mulf %161, %159 : vector<9x128xf32>
    %163 = vector.broadcast %158 : f32 to vector<9x128xf32>
    %164 = arith.mulf %163, %160 : vector<9x128xf32>
    %165 = arith.subf %162, %164 : vector<9x128xf32>
    %166 = arith.addf %150, %165 : vector<9x128xf32>
    %167 = vector.broadcast %157 : f32 to vector<9x128xf32>
    %168 = arith.mulf %167, %160 : vector<9x128xf32>
    %169 = vector.broadcast %158 : f32 to vector<9x128xf32>
    %170 = arith.mulf %169, %159 : vector<9x128xf32>
    %171 = arith.addf %168, %170 : vector<9x128xf32>
    %172 = arith.addf %156, %171 : vector<9x128xf32>
    %c8 = arith.constant 8 : index
    %173 = memref.load %arg1[%c8] : memref<9xf32, #tpu.memory_space<smem>>
    %c8_23 = arith.constant 8 : index
    %174 = memref.load %arg2[%c8_23] : memref<9xf32, #tpu.memory_space<smem>>
    %175 = vector.extract_strided_slice %135 {offsets = [2, 0], sizes = [9, 128], strides = [1, 1]} : vector<11x128xf32> to vector<9x128xf32>
    %176 = vector.extract_strided_slice %140 {offsets = [2, 0], sizes = [9, 128], strides = [1, 1]} : vector<11x128xf32> to vector<9x128xf32>
    %177 = vector.broadcast %173 : f32 to vector<9x128xf32>
    %178 = arith.mulf %177, %175 : vector<9x128xf32>
    %179 = vector.broadcast %174 : f32 to vector<9x128xf32>
    %180 = arith.mulf %179, %176 : vector<9x128xf32>
    %181 = arith.subf %178, %180 : vector<9x128xf32>
    %182 = arith.addf %166, %181 : vector<9x128xf32>
    %183 = vector.broadcast %173 : f32 to vector<9x128xf32>
    %184 = arith.mulf %183, %176 : vector<9x128xf32>
    %185 = vector.broadcast %174 : f32 to vector<9x128xf32>
    %186 = arith.mulf %185, %175 : vector<9x128xf32>
    %187 = arith.addf %184, %186 : vector<9x128xf32>
    %188 = arith.addf %172, %187 : vector<9x128xf32>
    %c0_24 = arith.constant 0 : index
    %c0_25 = arith.constant 0 : index
    %c0_26 = arith.constant 0 : index
    %189 = vector.load %arg5[%c0_24, %c0_25, %c0_26] : memref<2x9x128xf32, #tpu.memory_space<vmem>>, vector<1x9x128xf32>
    %190 = vector.shape_cast %189 : vector<1x9x128xf32> to vector<9x128xf32>
    %191 = vector.shape_cast %182 : vector<9x128xf32> to vector<1x9x128xf32>
    tpu.vector_store %arg5[%c0_24, %c0_25, %c0_26], %191 {strides = array<i32>} : memref<2x9x128xf32, #tpu.memory_space<vmem>>, vector<1x9x128xf32>,
    %c1_27 = arith.constant 1 : index
    %c0_28 = arith.constant 0 : index
    %c0_29 = arith.constant 0 : index
    %192 = vector.load %arg5[%c1_27, %c0_28, %c0_29] : memref<2x9x128xf32, #tpu.memory_space<vmem>>, vector<1x9x128xf32>
    %193 = vector.shape_cast %192 : vector<1x9x128xf32> to vector<9x128xf32>
    %194 = vector.shape_cast %188 : vector<9x128xf32> to vector<1x9x128xf32>
    tpu.vector_store %arg5[%c1_27, %c0_28, %c0_29], %194 {strides = array<i32>} : memref<2x9x128xf32, #tpu.memory_space<vmem>>, vector<1x9x128xf32>,
    return
  }
  func.func @transform_0(%arg0: i32) -> i32 {
    %c0_i32 = arith.constant 0 : i32
    %c0_i32_0 = arith.constant 0 : i32
    return %c0_i32 : i32
  }
  func.func @transform_1(%arg0: i32) -> i32 {
    %c0_i32 = arith.constant 0 : i32
    %c0_i32_0 = arith.constant 0 : i32
    return %c0_i32 : i32
  }
  func.func @transform_2(%arg0: i32) -> (i32, i32) {
    %c0_i32 = arith.constant 0 : i32
    %c0_i32_0 = arith.constant 0 : i32
    return %c0_i32, %arg0 : i32, i32
  }
  func.func @transform_3(%arg0: i32) -> (i32, i32) {
    %c0_i32 = arith.constant 0 : i32
    %c0_i32_0 = arith.constant 0 : i32
    return %c0_i32, %arg0 : i32, i32
  }
  func.func @transform_4(%arg0: i32) -> (i32, i32, i32) {
    %c0_i32 = arith.constant 0 : i32
    %c0_i32_0 = arith.constant 0 : i32
    %c0_i32_1 = arith.constant 0 : i32
    return %c0_i32, %c0_i32_0, %arg0 : i32, i32, i32
  }
}

module attributes {stable_mosaic.version = 11 : i64} {
  func.func @_mlp_kernel(%arg0: i32, %arg1: memref<8x128xf32, #tpu.memory_space<vmem>>, %arg2: memref<128x128xf32, #tpu.memory_space<vmem>>, %arg3: memref<1x128xf32, #tpu.memory_space<vmem>>, %arg4: memref<128x128xf32, #tpu.memory_space<vmem>>, %arg5: memref<1x128xf32, #tpu.memory_space<vmem>>, %arg6: memref<8x128xf32, #tpu.memory_space<vmem>>) attributes {dimension_semantics = [#tpu.dimension_semantics<parallel>], iteration_bounds = array<i64: 2>, scalar_prefetch = 0 : i64, scratch_operands = 0 : i64, tpu.core_type = #tpu.core_type<tc>, window_params = [{transform_indices = @transform_0, window_bounds = array<i64: 8, 128>}, {pipeline_mode = #tpu.pipeline_mode<synchronous>, transform_indices = @transform_1, window_bounds = array<i64: 128, 128>}, {pipeline_mode = #tpu.pipeline_mode<synchronous>, transform_indices = @transform_2, window_bounds = array<i64: 1, 128>}, {pipeline_mode = #tpu.pipeline_mode<synchronous>, transform_indices = @transform_3, window_bounds = array<i64: 128, 128>}, {pipeline_mode = #tpu.pipeline_mode<synchronous>, transform_indices = @transform_4, window_bounds = array<i64: 1, 128>}, {transform_indices = @transform_5, window_bounds = array<i64: 8, 128>}]} {
    %c0 = arith.constant 0 : index
    %c0_0 = arith.constant 0 : index
    %0 = vector.load %arg1[%c0, %c0_0] : memref<8x128xf32, #tpu.memory_space<vmem>>, vector<8x128xf32>
    %c0_1 = arith.constant 0 : index
    %c0_2 = arith.constant 0 : index
    %1 = vector.load %arg2[%c0_1, %c0_2] : memref<128x128xf32, #tpu.memory_space<vmem>>, vector<128x128xf32>
    %cst = arith.constant dense<0.000000e+00> : vector<8x128xf32>
    %2 = tpu.matmul %0, %1, %cst {dimension_numbers = #tpu.dot_dimension_numbers<[1], [0], [0], [1], [0, 0, 1, 1], [], []>} : vector<8x128xf32>, vector<128x128xf32>, vector<8x128xf32> -> vector<8x128xf32>
    %c0_3 = arith.constant 0 : index
    %c0_4 = arith.constant 0 : index
    %3 = vector.load %arg3[%c0_3, %c0_4] : memref<1x128xf32, #tpu.memory_space<vmem>>, vector<1x128xf32>
    %4 = vector.broadcast %3 : vector<1x128xf32> to vector<8x128xf32>
    %5 = arith.addf %2, %4 : vector<8x128xf32>
    %cst_5 = arith.constant 0.000000e+00 : f32
    %6 = vector.broadcast %cst_5 : f32 to vector<8x128xf32>
    %7 = arith.maximumf %5, %6 : vector<8x128xf32>
    %c0_6 = arith.constant 0 : index
    %c0_7 = arith.constant 0 : index
    %8 = vector.load %arg4[%c0_6, %c0_7] : memref<128x128xf32, #tpu.memory_space<vmem>>, vector<128x128xf32>
    %cst_8 = arith.constant dense<0.000000e+00> : vector<8x128xf32>
    %9 = tpu.matmul %7, %8, %cst_8 {dimension_numbers = #tpu.dot_dimension_numbers<[1], [0], [0], [1], [0, 0, 1, 1], [], []>} : vector<8x128xf32>, vector<128x128xf32>, vector<8x128xf32> -> vector<8x128xf32>
    %c0_9 = arith.constant 0 : index
    %c0_10 = arith.constant 0 : index
    %10 = vector.load %arg5[%c0_9, %c0_10] : memref<1x128xf32, #tpu.memory_space<vmem>>, vector<1x128xf32>
    %11 = vector.broadcast %10 : vector<1x128xf32> to vector<8x128xf32>
    %12 = arith.addf %9, %11 : vector<8x128xf32>
    %c0_11 = arith.constant 0 : index
    %c0_12 = arith.constant 0 : index
    %13 = vector.load %arg6[%c0_11, %c0_12] : memref<8x128xf32, #tpu.memory_space<vmem>>, vector<8x128xf32>
    tpu.vector_store %arg6[%c0_11, %c0_12], %12 {strides = array<i32>} : memref<8x128xf32, #tpu.memory_space<vmem>>, vector<8x128xf32>,
    return
  }
  func.func @transform_0(%arg0: i32) -> (i32, i32) {
    %c0_i32 = arith.constant 0 : i32
    %c0_i32_0 = arith.constant 0 : i32
    return %arg0, %c0_i32 : i32, i32
  }
  func.func @transform_1(%arg0: i32) -> (i32, i32) {
    %c0_i32 = arith.constant 0 : i32
    %c0_i32_0 = arith.constant 0 : i32
    %c0_i32_1 = arith.constant 0 : i32
    return %c0_i32, %c0_i32_0 : i32, i32
  }
  func.func @transform_2(%arg0: i32) -> (i32, i32) {
    %c0_i32 = arith.constant 0 : i32
    %c0_i32_0 = arith.constant 0 : i32
    %c0_i32_1 = arith.constant 0 : i32
    return %c0_i32, %c0_i32_0 : i32, i32
  }
  func.func @transform_3(%arg0: i32) -> (i32, i32) {
    %c0_i32 = arith.constant 0 : i32
    %c0_i32_0 = arith.constant 0 : i32
    %c0_i32_1 = arith.constant 0 : i32
    return %c0_i32, %c0_i32_0 : i32, i32
  }
  func.func @transform_4(%arg0: i32) -> (i32, i32) {
    %c0_i32 = arith.constant 0 : i32
    %c0_i32_0 = arith.constant 0 : i32
    %c0_i32_1 = arith.constant 0 : i32
    return %c0_i32, %c0_i32_0 : i32, i32
  }
  func.func @transform_5(%arg0: i32) -> (i32, i32) {
    %c0_i32 = arith.constant 0 : i32
    %c0_i32_0 = arith.constant 0 : i32
    return %arg0, %c0_i32 : i32, i32
  }
}

</mosaic_0001>

<llo_original>
// kernel: squeeze.6
$region0: #{squeeze.6}
  %s0 = inlined_call_operand.vmem [shape: f32[1,9,128], index: 0, kind: input, shape index: {}]
  %s1 = inlined_call_operand.vmem [shape: f32[9,2,4,16], index: 1, kind: output, shape index: {}]
  $region1: #{squeeze.6} parent=0
    #allocation0 [shape = 'u8[73728]{0}', space=vmem, size = 0x12000, scoped, tag = 'scoped mem for output reshape']
    %v2 = vld [vmem:[%s0] sm:$0xff]
    %vm3 = vcmask 130048
    %4 = vst.msk [vmem:[#allocation0] ss:$16 sm:$0x3] %vm3, %v2
    %5 = vst.msk [vmem:[#allocation0] ss:$16 sm:$0xc] %vm3, %v2
    %6 = vst.msk [vmem:[#allocation0] ss:$16 sm:$0x30] %vm3, %v2
    %7 = vst.msk [vmem:[#allocation0] ss:$16 sm:$0xc0] %vm3, %v2
    %s8 = scalar_lea.vmem %s0, 8
    %v9 = vld [vmem:[%s8] sm:$0x1]
    %vm10 = vcmask 130048
    %s11 = scalar_lea.vmem [#allocation0], 128
    %12 = vst.msk [vmem:[%s11] sm:$0x1] %vm10, %v9
    %v13 = vld [vmem:[%s0] sm:$0xff]
    %14 = vrot.lane.b32.xlu0 %v13, 112
    %v15 = vpop.permute.xlu0 %14
    %vm16 = vcmask 130048
    %s17 = scalar_lea.vmem [#allocation0], 1
    %18 = vst.msk [vmem:[%s17] ss:$16 sm:$0x3] %vm16, %v15
    %s19 = scalar_lea.vmem [#allocation0], 1
    %20 = vst.msk [vmem:[%s19] ss:$16 sm:$0xc] %vm16, %v15
    %s21 = scalar_lea.vmem [#allocation0], 1
    %22 = vst.msk [vmem:[%s21] ss:$16 sm:$0x30] %vm16, %v15
    %s23 = scalar_lea.vmem [#allocation0], 1
    %24 = vst.msk [vmem:[%s23] ss:$16 sm:$0xc0] %vm16, %v15
    %s25 = scalar_lea.vmem %s0, 8
    %v26 = vld [vmem:[%s25] sm:$0x1]
    %27 = vrot.lane.b32.xlu0 %v26, 112
    %v28 = vpop.permute.xlu0 %27
    %vm29 = vcmask 130048
    %s30 = scalar_lea.vmem [#allocation0], 129
    %31 = vst.msk [vmem:[%s30] sm:$0x1] %vm29, %v28
    %v32 = vld [vmem:[%s0] sm:$0xff]
    %33 = vrot.lane.b32.xlu0 %v32, 96
    %v34 = vpop.permute.xlu0 %33
    %vm35 = vcmask 130048
    %s36 = scalar_lea.vmem [#allocation0], 2
    %37 = vst.msk [vmem:[%s36] ss:$16 sm:$0x3] %vm35, %v34
    %s38 = scalar_lea.vmem [#allocation0], 2
    %39 = vst.msk [vmem:[%s38] ss:$16 sm:$0xc] %vm35, %v34
    %s40 = scalar_lea.vmem [#allocation0], 2
    %41 = vst.msk [vmem:[%s40] ss:$16 sm:$0x30] %vm35, %v34
    %s42 = scalar_lea.vmem [#allocation0], 2
    %43 = vst.msk [vmem:[%s42] ss:$16 sm:$0xc0] %vm35, %v34
    %s44 = scalar_lea.vmem %s0, 8
    %v45 = vld [vmem:[%s44] sm:$0x1]
    %46 = vrot.lane.b32.xlu0 %v45, 96
    %v47 = vpop.permute.xlu0 %46
    %vm48 = vcmask 130048
    %s49 = scalar_lea.vmem [#allocation0], 130
    %50 = vst.msk [vmem:[%s49] sm:$0x1] %vm48, %v47
    %v51 = vld [vmem:[%s0] sm:$0xff]
    %52 = vrot.lane.b32.xlu0 %v51, 80
    %v53 = vpop.permute.xlu0 %52
    %vm54 = vcmask 130048
    %s55 = scalar_lea.vmem [#allocation0], 3
    %56 = vst.msk [vmem:[%s55] ss:$16 sm:$0x3] %vm54, %v53
    %s57 = scalar_lea.vmem [#allocation0], 3
    %58 = vst.msk [vmem:[%s57] ss:$16 sm:$0xc] %vm54, %v53
    %s59 = scalar_lea.vmem [#allocation0], 3
    %60 = vst.msk [vmem:[%s59] ss:$16 sm:$0x30] %vm54, %v53
    %s61 = scalar_lea.vmem [#allocation0], 3
    %62 = vst.msk [vmem:[%s61] ss:$16 sm:$0xc0] %vm54, %v53
    %s63 = scalar_lea.vmem %s0, 8
    %v64 = vld [vmem:[%s63] sm:$0x1]
    %65 = vrot.lane.b32.xlu0 %v64, 80
    %v66 = vpop.permute.xlu0 %65
    %vm67 = vcmask 130048
    %s68 = scalar_lea.vmem [#allocation0], 131
    %69 = vst.msk [vmem:[%s68] sm:$0x1] %vm67, %v66
    %v70 = vld [vmem:[%s0] sm:$0xff]
    %71 = vrot.lane.b32.xlu0 %v70, 64
    %v72 = vpop.permute.xlu0 %71
    %vm73 = vcmask 130048
    %s74 = scalar_lea.vmem [#allocation0], 8
    %75 = vst.msk [vmem:[%s74] ss:$16 sm:$0x3] %vm73, %v72
    %s76 = scalar_lea.vmem [#allocation0], 8
    %77 = vst.msk [vmem:[%s76] ss:$16 sm:$0xc] %vm73, %v72
    %s78 = scalar_lea.vmem [#allocation0], 8
    %79 = vst.msk [vmem:[%s78] ss:$16 sm:$0x30] %vm73, %v72
    %s80 = scalar_lea.vmem [#allocation0], 8
    %81 = vst.msk [vmem:[%s80] ss:$16 sm:$0xc0] %vm73, %v72
    %s82 = scalar_lea.vmem %s0, 8
    %v83 = vld [vmem:[%s82] sm:$0x1]
    %84 = vrot.lane.b32.xlu0 %v83, 64
    %v85 = vpop.permute.xlu0 %84
    %vm86 = vcmask 130048
    %s87 = scalar_lea.vmem [#allocation0], 136
    %88 = vst.msk [vmem:[%s87] sm:$0x1] %vm86, %v85
    %v89 = vld [vmem:[%s0] sm:$0xff]
    %90 = vrot.lane.b32.xlu0 %v89, 48
    %v91 = vpop.permute.xlu0 %90
    %vm92 = vcmask 130048
    %s93 = scalar_lea.vmem [#allocation0], 9
    %94 = vst.msk [vmem:[%s93] ss:$16 sm:$0x3] %vm92, %v91
    %s95 = scalar_lea.vmem [#allocation0], 9
    %96 = vst.msk [vmem:[%s95] ss:$16 sm:$0xc] %vm92, %v91
    %s97 = scalar_lea.vmem [#allocation0], 9
    %98 = vst.msk [vmem:[%s97] ss:$16 sm:$0x30] %vm92, %v91
    %s99 = scalar_lea.vmem [#allocation0], 9
    %100 = vst.msk [vmem:[%s99] ss:$16 sm:$0xc0] %vm92, %v91
    %s101 = scalar_lea.vmem %s0, 8
    %v102 = vld [vmem:[%s101] sm:$0x1]
    %103 = vrot.lane.b32.xlu0 %v102, 48
    %v104 = vpop.permute.xlu0 %103
    %vm105 = vcmask 130048
    %s106 = scalar_lea.vmem [#allocation0], 137
    %107 = vst.msk [vmem:[%s106] sm:$0x1] %vm105, %v104
    %v108 = vld [vmem:[%s0] sm:$0xff]
    %109 = vrot.lane.b32.xlu0 %v108, 32
    %v110 = vpop.permute.xlu0 %109
    %vm111 = vcmask 130048
    %s112 = scalar_lea.vmem [#allocation0], 10
    %113 = vst.msk [vmem:[%s112] ss:$16 sm:$0x3] %vm111, %v110
    %s114 = scalar_lea.vmem [#allocation0], 10
    %115 = vst.msk [vmem:[%s114] ss:$16 sm:$0xc] %vm111, %v110
    %s116 = scalar_lea.vmem [#allocation0], 10
    %117 = vst.msk [vmem:[%s116] ss:$16 sm:$0x30] %vm111, %v110
    %s118 = scalar_lea.vmem [#allocation0], 10
    %119 = vst.msk [vmem:[%s118] ss:$16 sm:$0xc0] %vm111, %v110
    %s120 = scalar_lea.vmem %s0, 8
    %v121 = vld [vmem:[%s120] sm:$0x1]
    %122 = vrot.lane.b32.xlu0 %v121, 32
    %v123 = vpop.permute.xlu0 %122
    %vm124 = vcmask 130048
    %s125 = scalar_lea.vmem [#allocation0], 138
    %126 = vst.msk [vmem:[%s125] sm:$0x1] %vm124, %v123
    %v127 = vld [vmem:[%s0] sm:$0xff]
    %128 = vrot.lane.b32.xlu0 %v127, 16
    %v129 = vpop.permute.xlu0 %128
    %vm130 = vcmask 130048
    %s131 = scalar_lea.vmem [#allocation0], 11
    %132 = vst.msk [vmem:[%s131] ss:$16 sm:$0x3] %vm130, %v129
    %s133 = scalar_lea.vmem [#allocation0], 11
    %134 = vst.msk [vmem:[%s133] ss:$16 sm:$0xc] %vm130, %v129
    %s135 = scalar_lea.vmem [#allocation0], 11
    %136 = vst.msk [vmem:[%s135] ss:$16 sm:$0x30] %vm130, %v129
    %s137 = scalar_lea.vmem [#allocation0], 11
    %138 = vst.msk [vmem:[%s137] ss:$16 sm:$0xc0] %vm130, %v129
    %s139 = scalar_lea.vmem %s0, 8
    %v140 = vld [vmem:[%s139] sm:$0x1]
    %141 = vrot.lane.b32.xlu0 %v140, 16
    %v142 = vpop.permute.xlu0 %141
    %vm143 = vcmask 130048
    %s144 = scalar_lea.vmem [#allocation0], 139
    %145 = vst.msk [vmem:[%s144] sm:$0x1] %vm143, %v142
    %s147 = sshllo.u32 0, 4
    %v149 = vld [vmem:[#allocation0] sm:%s147]
    %s150 = sshllo.u32 0, 4
    %151 = vst [vmem:[%s1] sm:%s150] %v149
    %s152 = scalar_lea.vmem [#allocation0], 8
    %v153 = vld [vmem:[%s152] sm:%s147]
    %s154 = sshllo.u32 0, 4
    %s155 = scalar_lea.vmem %s1, 4
    %156 = vst [vmem:[%s155] sm:%s154] %v153
    %s157 = scalar_lea.vmem [#allocation0], 16
    %v158 = vld [vmem:[%s157] sm:%s147]
    %s159 = sshllo.u32 0, 4
    %s160 = smul.addr 4, 2
    %s161 = scalar_lea.vmem %s1, %s160
    %162 = vst [vmem:[%s161] sm:%s159] %v158
    %s163 = scalar_lea.vmem [#allocation0], 24
    %v164 = vld [vmem:[%s163] sm:%s147]
    %s165 = sshllo.u32 0, 4
    %s166 = smul.addr 4, 3
    %s167 = scalar_lea.vmem %s1, %s166
    %168 = vst [vmem:[%s167] sm:%s165] %v164
    %s169 = scalar_lea.vmem [#allocation0], 32
    %v170 = vld [vmem:[%s169] sm:%s147]
    %s171 = sshllo.u32 0, 4
    %s172 = smul.addr 4, 4
    %s173 = scalar_lea.vmem %s1, %s172
    %174 = vst [vmem:[%s173] sm:%s171] %v170
    %s175 = scalar_lea.vmem [#allocation0], 40
    %v176 = vld [vmem:[%s175] sm:%s147]
    %s177 = sshllo.u32 0, 4
    %s178 = smul.addr 4, 5
    %s179 = scalar_lea.vmem %s1, %s178
    %180 = vst [vmem:[%s179] sm:%s177] %v176
    %s181 = scalar_lea.vmem [#allocation0], 48
    %v182 = vld [vmem:[%s181] sm:%s147]
    %s183 = sshllo.u32 0, 4
    %s184 = smul.addr 4, 6
    %s185 = scalar_lea.vmem %s1, %s184
    %186 = vst [vmem:[%s185] sm:%s183] %v182
    %s187 = scalar_lea.vmem [#allocation0], 56
    %v188 = vld [vmem:[%s187] sm:%s147]
    %s189 = sshllo.u32 0, 4
    %s190 = smul.addr 4, 7
    %s191 = scalar_lea.vmem %s1, %s190
    %192 = vst [vmem:[%s191] sm:%s189] %v188
    %s193 = scalar_lea.vmem [#allocation0], 64
    %v194 = vld [vmem:[%s193] sm:%s147]
    %s195 = sshllo.u32 0, 4
    %s196 = smul.addr 4, 8
    %s197 = scalar_lea.vmem %s1, %s196
    %198 = vst [vmem:[%s197] sm:%s195] %v194
    %s199 = scalar_lea.vmem [#allocation0], 72
    %v200 = vld [vmem:[%s199] sm:%s147]
    %s201 = sshllo.u32 0, 4
    %s202 = smul.addr 4, 9
    %s203 = scalar_lea.vmem %s1, %s202
    %204 = vst [vmem:[%s203] sm:%s201] %v200
    %s205 = scalar_lea.vmem [#allocation0], 80
    %v206 = vld [vmem:[%s205] sm:%s147]
    %s207 = sshllo.u32 0, 4
    %s208 = smul.addr 4, 10
    %s209 = scalar_lea.vmem %s1, %s208
    %210 = vst [vmem:[%s209] sm:%s207] %v206
    %s211 = scalar_lea.vmem [#allocation0], 88
    %v212 = vld [vmem:[%s211] sm:%s147]
    %s213 = sshllo.u32 0, 4
    %s214 = smul.addr 4, 11
    %s215 = scalar_lea.vmem %s1, %s214
    %216 = vst [vmem:[%s215] sm:%s213] %v212
    %s217 = scalar_lea.vmem [#allocation0], 96
    %v218 = vld [vmem:[%s217] sm:%s147]
    %s219 = sshllo.u32 0, 4
    %s220 = smul.addr 4, 12
    %s221 = scalar_lea.vmem %s1, %s220
    %222 = vst [vmem:[%s221] sm:%s219] %v218
    %s223 = scalar_lea.vmem [#allocation0], 104
    %v224 = vld [vmem:[%s223] sm:%s147]
    %s225 = sshllo.u32 0, 4
    %s226 = smul.addr 4, 13
    %s227 = scalar_lea.vmem %s1, %s226
    %228 = vst [vmem:[%s227] sm:%s225] %v224
    %s229 = scalar_lea.vmem [#allocation0], 112
    %v230 = vld [vmem:[%s229] sm:%s147]
    %s231 = sshllo.u32 0, 4
    %s232 = smul.addr 4, 14
    %s233 = scalar_lea.vmem %s1, %s232
    %234 = vst [vmem:[%s233] sm:%s231] %v230
    %s235 = scalar_lea.vmem [#allocation0], 120
    %v236 = vld [vmem:[%s235] sm:%s147]
    %s237 = sshllo.u32 0, 4
    %s238 = smul.addr 4, 15
    %s239 = scalar_lea.vmem %s1, %s238
    %240 = vst [vmem:[%s239] sm:%s237] %v236
    %s241 = scalar_lea.vmem [#allocation0], 128
    %v242 = vld [vmem:[%s241] sm:%s147]
    %s243 = sshllo.u32 0, 4
    %s244 = smul.addr 4, 16
    %s245 = scalar_lea.vmem %s1, %s244
    %246 = vst [vmem:[%s245] sm:%s243] %v242
    %s247 = scalar_lea.vmem [#allocation0], 136
    %v248 = vld [vmem:[%s247] sm:%s147]
    %s249 = sshllo.u32 0, 4
    %s250 = smul.addr 4, 17
    %s251 = scalar_lea.vmem %s1, %s250
    %252 = vst [vmem:[%s251] sm:%s249] %v248

// kernel: reverse.0
$region0: #{reverse.0}
  %s0 = inlined_call_operand.vmem [shape: f32[2,4,16,7], index: 0, kind: input, shape index: {}]
  %s1 = inlined_call_operand.vmem [shape: f32[2,4,16,7], index: 1, kind: output, shape index: {}]
  $region1: #{reverse.0} parent=0
    #allocation0 [shape = 'u8[65536]{0}', space=vmem, size = 0x10000, scoped, tag = 'operand span for operand 0']
    #allocation1 [shape = 'u8[32768]{0}', space=vmem, size = 0x8000, scoped, tag = 'operand span for operand 1']
    %s2 = scalar_lea.vmem [#allocation0], 8
    // Predicated region
    $region2: #{reverse.0} parent=1 // pred_check
      _
    $region3: #{reverse.0} parent=1 // pred_check_branch
      %4 = sbr.rel (0) target = $region5
    $region4: #{reverse.0} parent=1 // pred_region
      // Predicated region
      $region6: #{reverse.0} parent=4 // pred_check
        _
      $region7: #{reverse.0} parent=4 // pred_check_branch
        %6 = sbr.rel (0) target = $region9
      $region8: #{reverse.0} parent=4 // pred_region
        // Predicated region
        $region21: #{reverse.0} parent=8 // pred_check
          _
        $region22: #{reverse.0} parent=8 // pred_check_branch
          %35 = sbr.rel (0) target = $region24
        $region23: #{reverse.0} parent=8 // pred_region
          loop: start=0, step=1, limit=1
          $region25: #{reverse.0} parent=23 // loop_pre_header
            _
          $region26: #{reverse.0} parent=23 // loop_header
            %s37 = sphi 0, %s41
            %p38 = scmp.ge.s32.totalorder %s37, 1
            %s42 = sphi %s0, %s0
            %s43 = sphi %s2, %s2
          $region27: #{reverse.0} parent=23 // loop_header_branch
            %40 = sbr.rel (%p38) target = $region31
          $region28: #{reverse.0} parent=23 // loop_body
            %v44 = vld [vmem:[%s42] sm:$0xff]
            %45 = vst [vmem:[%s43] sm:$0xff] %v44
            %v46 = vld [vmem:[%s42 + $0x8] sm:$0xff]
            %47 = vst [vmem:[%s43 + $0x10] sm:$0xff] %v46
            %v48 = vld [vmem:[%s42 + $0x10] sm:$0xff]
            %49 = vst [vmem:[%s43 + $0x20] sm:$0xff] %v48
            %v50 = vld [vmem:[%s42 + $0x18] sm:$0xff]
            %51 = vst [vmem:[%s43 + $0x30] sm:$0xff] %v50
            %v52 = vld [vmem:[%s42 + $0x20] sm:$0xff]
            %53 = vst [vmem:[%s43 + $0x40] sm:$0xff] %v52
            %v54 = vld [vmem:[%s42 + $0x28] sm:$0xff]
            %55 = vst [vmem:[%s43 + $0x50] sm:$0xff] %v54
            %v56 = vld [vmem:[%s42 + $0x30] sm:$0xff]
            %57 = vst [vmem:[%s43 + $0x60] sm:$0xff] %v56
            %v58 = vld [vmem:[%s42 + $0x38] sm:$0xff]
            %59 = vst [vmem:[%s43 + $0x70] sm:$0xff] %v58
          $region29: #{reverse.0} parent=23 // loop_footer
            %s41 = sadd.s32 1, %s37
          $region30: #{reverse.0} parent=23 // loop_footer_branch
            %36 = sbr.rel target = $region26
          $region31: #{reverse.0} parent=23 // loop_exit
            _
        $region24: #{reverse.0} parent=8 // pred_fallthru
          _
        // Predicated region
        $region32: #{reverse.0} parent=8 // pred_check
          _
        $region33: #{reverse.0} parent=8 // pred_check_branch
          %61 = sbr.rel target = $region35
        $region34: #{reverse.0} parent=8 // pred_region
          _
        $region35: #{reverse.0} parent=8 // pred_fallthru
          _
      $region9: #{reverse.0} parent=4 // pred_fallthru
        _
      // Predicated region
      $region10: #{reverse.0} parent=4 // pred_check
        _
      $region11: #{reverse.0} parent=4 // pred_check_branch
        %8 = sbr.rel target = $region13
      $region12: #{reverse.0} parent=4 // pred_region
        loop: start=0, step=1, limit=1
        $region14: #{reverse.0} parent=12 // loop_pre_header
          _
        $region15: #{reverse.0} parent=12 // loop_header
          %s11 = sphi 0, %s15
          %p12 = scmp.ge.s32.totalorder %s11, 1
          %s16 = sphi %s0, %s0
          %s17 = sphi %s2, %s2
        $region16: #{reverse.0} parent=12 // loop_header_branch
          %14 = sbr.rel (%p12) target = $region20
        $region17: #{reverse.0} parent=12 // loop_body
          %v18 = vld [vmem:[%s16] sm:$0xff]
          %19 = vst [vmem:[%s17] sm:$0xff] %v18
          %v20 = vld [vmem:[%s16 + $0x8] sm:$0xff]
          %21 = vst [vmem:[%s17 + $0x10] sm:$0xff] %v20
          %v22 = vld [vmem:[%s16 + $0x10] sm:$0xff]
          %23 = vst [vmem:[%s17 + $0x20] sm:$0xff] %v22
          %v24 = vld [vmem:[%s16 + $0x18] sm:$0xff]
          %25 = vst [vmem:[%s17 + $0x30] sm:$0xff] %v24
          %v26 = vld [vmem:[%s16 + $0x20] sm:$0xff]
          %27 = vst [vmem:[%s17 + $0x40] sm:$0xff] %v26
          %v28 = vld [vmem:[%s16 + $0x28] sm:$0xff]
          %29 = vst [vmem:[%s17 + $0x50] sm:$0xff] %v28
          %v30 = vld [vmem:[%s16 + $0x30] sm:$0xff]
          %31 = vst [vmem:[%s17 + $0x60] sm:$0xff] %v30
          %v32 = vld [vmem:[%s16 + $0x38] sm:$0xff]
          %33 = vst [vmem:[%s17 + $0x70] sm:$0xff] %v32
        $region18: #{reverse.0} parent=12 // loop_footer
          %s15 = sadd.s32 1, %s11
        $region19: #{reverse.0} parent=12 // loop_footer_branch
          %10 = sbr.rel target = $region15
        $region20: #{reverse.0} parent=12 // loop_exit
          _
      $region13: #{reverse.0} parent=4 // pred_fallthru
        _
    $region5: #{reverse.0} parent=1 // pred_fallthru
      _
    %62 = vnop
    %s63 = scalar_lea.vmem [#allocation0], 7
    %v64 = vld [vmem:[%s63] ss:$-1 sm:$0xff]
    %v65 = vrot.slane %v64, 1
    %66 = vst [vmem:[#allocation1] sm:$0xff] %v65
    %s67 = scalar_lea.vmem [#allocation0], 8
    %s68 = scalar_lea.vmem %s67, 7 [#allocation0]
    %v69 = vld [vmem:[%s68] ss:$-1 sm:$0xff]
    %v70 = vrot.slane %v69, 1
    %v71 = vlaneseq
    %v72 = vshrl.u32 %v71, 7
    %vm73 = vcmp.lt.s32.totalorder %v72, 7
    %74 = vst.msk [vmem:[#allocation1] sm:$0xff] %vm73, %v70
    %s75 = scalar_lea.vmem [#allocation1], 8
    %s76 = scalar_lea.vmem [#allocation0], 16
    %s77 = scalar_lea.vmem %s76, 7 [#allocation0]
    %v78 = vld [vmem:[%s77] ss:$-1 sm:$0xff]
    %v79 = vrot.slane %v78, 1
    %80 = vst [vmem:[%s75] sm:$0xff] %v79
    %s81 = scalar_lea.vmem %s76, 8 [#allocation0]
    %s82 = scalar_lea.vmem %s81, 7 [#allocation0]
    %v83 = vld [vmem:[%s82] ss:$-1 sm:$0xff]
    %v84 = vrot.slane %v83, 1
    %v85 = vlaneseq
    %v86 = vshrl.u32 %v85, 7
    %vm87 = vcmp.lt.s32.totalorder %v86, 7
    %88 = vst.msk [vmem:[%s75] sm:$0xff] %vm87, %v84
    %s89 = scalar_lea.vmem [#allocation1], 16
    %s90 = scalar_lea.vmem [#allocation0], 32
    %s91 = scalar_lea.vmem %s90, 7 [#allocation0]
    %v92 = vld [vmem:[%s91] ss:$-1 sm:$0xff]
    %v93 = vrot.slane %v92, 1
    %94 = vst [vmem:[%s89] sm:$0xff] %v93
    %s95 = scalar_lea.vmem %s90, 8 [#allocation0]
    %s96 = scalar_lea.vmem %s95, 7 [#allocation0]
    %v97 = vld [vmem:[%s96] ss:$-1 sm:$0xff]
    %v98 = vrot.slane %v97, 1
    %v99 = vlaneseq
    %v100 = vshrl.u32 %v99, 7
    %vm101 = vcmp.lt.s32.totalorder %v100, 7
    %102 = vst.msk [vmem:[%s89] sm:$0xff] %vm101, %v98
    %s103 = scalar_lea.vmem [#allocation1], 24
    %s104 = scalar_lea.vmem [#allocation0], 48
    %s105 = scalar_lea.vmem %s104, 7 [#allocation0]
    %v106 = vld [vmem:[%s105] ss:$-1 sm:$0xff]
    %v107 = vrot.slane %v106, 1
    %108 = vst [vmem:[%s103] sm:$0xff] %v107
    %s109 = scalar_lea.vmem %s104, 8 [#allocation0]
    %s110 = scalar_lea.vmem %s109, 7 [#allocation0]
    %v111 = vld [vmem:[%s110] ss:$-1 sm:$0xff]
    %v112 = vrot.slane %v111, 1
    %v113 = vlaneseq
    %v114 = vshrl.u32 %v113, 7
    %vm115 = vcmp.lt.s32.totalorder %v114, 7
    %116 = vst.msk [vmem:[%s103] sm:$0xff] %vm115, %v112
    %s117 = scalar_lea.vmem [#allocation1], 32
    %s118 = scalar_lea.vmem [#allocation0], 64
    %s119 = scalar_lea.vmem %s118, 7 [#allocation0]
    %v120 = vld [vmem:[%s119] ss:$-1 sm:$0xff]
    %v121 = vrot.slane %v120, 1
    %122 = vst [vmem:[%s117] sm:$0xff] %v121
    %s123 = scalar_lea.vmem %s118, 8 [#allocation0]
    %s124 = scalar_lea.vmem %s123, 7 [#allocation0]
    %v125 = vld [vmem:[%s124] ss:$-1 sm:$0xff]
    %v126 = vrot.slane %v125, 1
    %v127 = vlaneseq
    %v128 = vshrl.u32 %v127, 7
    %vm129 = vcmp.lt.s32.totalorder %v128, 7
    %130 = vst.msk [vmem:[%s117] sm:$0xff] %vm129, %v126
    %s131 = scalar_lea.vmem [#allocation1], 40
    %s132 = scalar_lea.vmem [#allocation0], 80
    %s133 = scalar_lea.vmem %s132, 7 [#allocation0]
    %v134 = vld [vmem:[%s133] ss:$-1 sm:$0xff]
    %v135 = vrot.slane %v134, 1
    %136 = vst [vmem:[%s131] sm:$0xff] %v135
    %s137 = scalar_lea.vmem %s132, 8 [#allocation0]
    %s138 = scalar_lea.vmem %s137, 7 [#allocation0]
    %v139 = vld [vmem:[%s138] ss:$-1 sm:$0xff]
    %v140 = vrot.slane %v139, 1
    %v141 = vlaneseq
    %v142 = vshrl.u32 %v141, 7
    %vm143 = vcmp.lt.s32.totalorder %v142, 7
    %144 = vst.msk [vmem:[%s131] sm:$0xff] %vm143, %v140
    %s145 = scalar_lea.vmem [#allocation1], 48
    %s146 = scalar_lea.vmem [#allocation0], 96
    %s147 = scalar_lea.vmem %s146, 7 [#allocation0]
    %v148 = vld [vmem:[%s147] ss:$-1 sm:$0xff]
    %v149 = vrot.slane %v148, 1
    %150 = vst [vmem:[%s145] sm:$0xff] %v149
    %s151 = scalar_lea.vmem %s146, 8 [#allocation0]
    %s152 = scalar_lea.vmem %s151, 7 [#allocation0]
    %v153 = vld [vmem:[%s152] ss:$-1 sm:$0xff]
    %v154 = vrot.slane %v153, 1
    %v155 = vlaneseq
    %v156 = vshrl.u32 %v155, 7
    %vm157 = vcmp.lt.s32.totalorder %v156, 7
    %158 = vst.msk [vmem:[%s145] sm:$0xff] %vm157, %v154
    %s159 = scalar_lea.vmem [#allocation1], 56
    %s160 = scalar_lea.vmem [#allocation0], 112
    %s161 = scalar_lea.vmem %s160, 7 [#allocation0]
    %v162 = vld [vmem:[%s161] ss:$-1 sm:$0xff]
    %v163 = vrot.slane %v162, 1
    %164 = vst [vmem:[%s159] sm:$0xff] %v163
    %s165 = scalar_lea.vmem %s160, 8 [#allocation0]
    %s166 = scalar_lea.vmem %s165, 7 [#allocation0]
    %v167 = vld [vmem:[%s166] ss:$-1 sm:$0xff]
    %v168 = vrot.slane %v167, 1
    %v169 = vlaneseq
    %v170 = vshrl.u32 %v169, 7
    %vm171 = vcmp.lt.s32.totalorder %v170, 7
    %172 = vst.msk [vmem:[%s159] sm:$0xff] %vm171, %v168
    // Predicated region
    $region36: #{reverse.0} parent=1 // pred_check
      _
    $region37: #{reverse.0} parent=1 // pred_check_branch
      %174 = sbr.rel (0) target = $region39
    $region38: #{reverse.0} parent=1 // pred_region
      // Predicated region
      $region40: #{reverse.0} parent=38 // pred_check
        _
      $region41: #{reverse.0} parent=38 // pred_check_branch
        %176 = sbr.rel (0) target = $region43
      $region42: #{reverse.0} parent=38 // pred_region
        // Predicated region
        $region55: #{reverse.0} parent=42 // pred_check
          _
        $region56: #{reverse.0} parent=42 // pred_check_branch
          %205 = sbr.rel (0) target = $region58
        $region57: #{reverse.0} parent=42 // pred_region
          loop: start=0, step=1, limit=1
          $region59: #{reverse.0} parent=57 // loop_pre_header
            _
          $region60: #{reverse.0} parent=57 // loop_header
            %s207 = sphi 0, %s211
            %p208 = scmp.ge.s32.totalorder %s207, 1
            %s212 = sphi [#allocation1], [#allocation1]
            %s213 = sphi %s1, %s1
          $region61: #{reverse.0} parent=57 // loop_header_branch
            %210 = sbr.rel (%p208) target = $region65
          $region62: #{reverse.0} parent=57 // loop_body
            %v214 = vld [vmem:[%s212] sm:$0xff]
            %215 = vst [vmem:[%s213] sm:$0xff] %v214
            %v216 = vld [vmem:[%s212 + $0x8] sm:$0xff]
            %217 = vst [vmem:[%s213 + $0x8] sm:$0xff] %v216
            %v218 = vld [vmem:[%s212 + $0x10] sm:$0xff]
            %219 = vst [vmem:[%s213 + $0x10] sm:$0xff] %v218
            %v220 = vld [vmem:[%s212 + $0x18] sm:$0xff]
            %221 = vst [vmem:[%s213 + $0x18] sm:$0xff] %v220
            %v222 = vld [vmem:[%s212 + $0x20] sm:$0xff]
            %223 = vst [vmem:[%s213 + $0x20] sm:$0xff] %v222
            %v224 = vld [vmem:[%s212 + $0x28] sm:$0xff]
            %225 = vst [vmem:[%s213 + $0x28] sm:$0xff] %v224
            %v226 = vld [vmem:[%s212 + $0x30] sm:$0xff]
            %227 = vst [vmem:[%s213 + $0x30] sm:$0xff] %v226
            %v228 = vld [vmem:[%s212 + $0x38] sm:$0xff]
            %229 = vst [vmem:[%s213 + $0x38] sm:$0xff] %v228
          $region63: #{reverse.0} parent=57 // loop_footer
            %s211 = sadd.s32 1, %s207
          $region64: #{reverse.0} parent=57 // loop_footer_branch
            %206 = sbr.rel target = $region60
          $region65: #{reverse.0} parent=57 // loop_exit
            _
        $region58: #{reverse.0} parent=42 // pred_fallthru
          _
        // Predicated region
        $region66: #{reverse.0} parent=42 // pred_check
          _
        $region67: #{reverse.0} parent=42 // pred_check_branch
          %231 = sbr.rel target = $region69
        $region68: #{reverse.0} parent=42 // pred_region
          _
        $region69: #{reverse.0} parent=42 // pred_fallthru
          _
      $region43: #{reverse.0} parent=38 // pred_fallthru
        _
      // Predicated region
      $region44: #{reverse.0} parent=38 // pred_check
        _
      $region45: #{reverse.0} parent=38 // pred_check_branch
        %178 = sbr.rel target = $region47
      $region46: #{reverse.0} parent=38 // pred_region
        loop: start=0, step=1, limit=1
        $region48: #{reverse.0} parent=46 // loop_pre_header
          _
        $region49: #{reverse.0} parent=46 // loop_header
          %s181 = sphi 0, %s185
          %p182 = scmp.ge.s32.totalorder %s181, 1
          %s186 = sphi [#allocation1], [#allocation1]
          %s187 = sphi %s1, %s1
        $region50: #{reverse.0} parent=46 // loop_header_branch
          %184 = sbr.rel (%p182) target = $region54
        $region51: #{reverse.0} parent=46 // loop_body
          %v188 = vld [vmem:[%s186] sm:$0xff]
          %189 = vst [vmem:[%s187] sm:$0xff] %v188
          %v190 = vld [vmem:[%s186 + $0x8] sm:$0xff]
          %191 = vst [vmem:[%s187 + $0x8] sm:$0xff] %v190
          %v192 = vld [vmem:[%s186 + $0x10] sm:$0xff]
          %193 = vst [vmem:[%s187 + $0x10] sm:$0xff] %v192
          %v194 = vld [vmem:[%s186 + $0x18] sm:$0xff]
          %195 = vst [vmem:[%s187 + $0x18] sm:$0xff] %v194
          %v196 = vld [vmem:[%s186 + $0x20] sm:$0xff]
          %197 = vst [vmem:[%s187 + $0x20] sm:$0xff] %v196
          %v198 = vld [vmem:[%s186 + $0x28] sm:$0xff]
          %199 = vst [vmem:[%s187 + $0x28] sm:$0xff] %v198
          %v200 = vld [vmem:[%s186 + $0x30] sm:$0xff]
          %201 = vst [vmem:[%s187 + $0x30] sm:$0xff] %v200
          %v202 = vld [vmem:[%s186 + $0x38] sm:$0xff]
          %203 = vst [vmem:[%s187 + $0x38] sm:$0xff] %v202
        $region52: #{reverse.0} parent=46 // loop_footer
          %s185 = sadd.s32 1, %s181
        $region53: #{reverse.0} parent=46 // loop_footer_branch
          %180 = sbr.rel target = $region49
        $region54: #{reverse.0} parent=46 // loop_exit
          _
      $region47: #{reverse.0} parent=38 // pred_fallthru
        _
    $region39: #{reverse.0} parent=1 // pred_fallthru
      _
    %232 = vnop

// kernel: fno2d_forward.2
$region0: #{fno2d_forward.2}
  #allocation0 [shape = 'u32[]', space=smem, size = 0x4, offset = 0x4, fixed_abs, tag = 'smem constant byte address 0x4 - core index']
  #allocation1 [shape = 'u32[144,128]{1,0:T(1,128)}', space=vmem, size = 0x12000, scoped, tag = 'internal scratch']
  %s0 = inlined_call_operand.vmem [shape: f32[9], index: 0, kind: input, shape index: {}]
  %s1 = inlined_call_operand.vmem [shape: f32[9], index: 1, kind: input, shape index: {}]
  %s2 = inlined_call_operand.vmem [shape: f32[11,128], index: 2, kind: input, shape index: {}]
  %s3 = inlined_call_operand.vmem [shape: f32[11,128], index: 3, kind: input, shape index: {}]
  %s4 = inlined_call_operand.vmem [shape: f32[2,9,128], index: 4, kind: output, shape index: {}]
  %s5 = sld [smem:[#allocation0]]
  $region34: #{fno2d_forward.2} parent=0
    _
  %s7 = ssub.s32 1, %s5
  %s8 = scalar_select 0, %s7, %s5
  $region1: #{fno2d_forward.2} parent=0
    #allocation2 [shape = 'u8[512]{0}', space=smem, size = 0x200, scoped, tag = 'input window, operand 0, single buffered']
    #allocation3 [shape = 's32[1]{0}', space=sflag, size = 0x4, scoped, tag = 'scoped memory for fno2d_forward.2']
    #allocation4 [shape = 'u8[512]{0}', space=smem, size = 0x200, scoped, tag = 'input window, operand 1, single buffered']
    #allocation5 [shape = 's32[1]{0}', space=sflag, size = 0x4, scoped, tag = 'scoped memory for fno2d_forward.2']
    %9 = vsyncpa [#allocation3], 0
    %10 = vsyncpa [#allocation5], 0
    // Predicated region
    $region2: #{fno2d_forward.2} parent=1 // pred_check
      _
    $region3: #{fno2d_forward.2} parent=1 // pred_check_branch
      %12 = sbr.rel (0) target = $region5
    $region4: #{fno2d_forward.2} parent=1 // pred_region
      %s14 = ssub.s32 16, 16
      %15 = vsyncadd [#allocation3], %s14
      %s17 = sshll.u32 %s0, 4
      %s18 = int_to_ptr.vmem [resolvable:$true] %s17
      %20 = dma.vmem_to_smem %s18, 16, [#allocation2], [#allocation3]
    $region5: #{fno2d_forward.2} parent=1 // pred_fallthru
      _
    // Predicated region
    $region6: #{fno2d_forward.2} parent=1 // pred_check
      _
    $region7: #{fno2d_forward.2} parent=1 // pred_check_branch
      %22 = sbr.rel (0) target = $region9
    $region8: #{fno2d_forward.2} parent=1 // pred_region
      %s24 = ssub.s32 16, 16
      %25 = vsyncadd [#allocation5], %s24
      %s27 = sshll.u32 %s1, 4
      %s28 = int_to_ptr.vmem [resolvable:$true] %s27
      %30 = dma.vmem_to_smem %s28, 16, [#allocation4], [#allocation5]
    $region9: #{fno2d_forward.2} parent=1 // pred_fallthru
      _
    // Predicated region
    $region10: #{fno2d_forward.2} parent=1 // pred_check
      _
    $region11: #{fno2d_forward.2} parent=1 // pred_check_branch
      %32 = sbr.rel (0) target = $region13
    $region12: #{fno2d_forward.2} parent=1 // pred_region
      _
    $region13: #{fno2d_forward.2} parent=1 // pred_fallthru
      _
    // Predicated region
    $region14: #{fno2d_forward.2} parent=1 // pred_check
      _
    $region15: #{fno2d_forward.2} parent=1 // pred_check_branch
      %34 = sbr.rel (0) target = $region17
    $region16: #{fno2d_forward.2} parent=1 // pred_region
      _
    $region17: #{fno2d_forward.2} parent=1 // pred_fallthru
      _
    // Predicated region
    $region18: #{fno2d_forward.2} parent=1 // pred_check
      _
    $region19: #{fno2d_forward.2} parent=1 // pred_check_branch
      %36 = sbr.rel (0) target = $region21
    $region20: #{fno2d_forward.2} parent=1 // pred_region
      %37 = dma.done [#allocation3], 16
    $region21: #{fno2d_forward.2} parent=1 // pred_fallthru
      _
    // Predicated region
    $region22: #{fno2d_forward.2} parent=1 // pred_check
      _
    $region23: #{fno2d_forward.2} parent=1 // pred_check_branch
      %39 = sbr.rel (0) target = $region25
    $region24: #{fno2d_forward.2} parent=1 // pred_region
      %40 = dma.done [#allocation5], 16
    $region25: #{fno2d_forward.2} parent=1 // pred_fallthru
      _
    %41 = sfence
    %v42 = vld [vmem:[%s2] sm:$0xff]
    %v43 = vld [vmem:[%s2 + $0x8] sm:$0x7]
    %v44 = vld [vmem:[%s3] sm:$0xff]
    %v45 = vld [vmem:[%s3 + $0x8] sm:$0x7]
    %v46 = vlaneseq
    %v47 = vand.u32 %v46, 127
    %vm48 = vcmp.lt.s32.totalorder %v47, 0
    %v49 = vsub.s32 0, %v47
    %v50 = vsel %vm48, %v49, %v47
    %v51 = vshrl.u32 %v50, 4
    %v52 = vand.u32 %v50, 15
    %v53 = vsub.s32 0, %v52
    %v54 = vsel %vm48, %v53, %v52
    %vm55 = vcmp.ne.s32.totalorder %v54, 0
    %vm56 = vcmp.lt.s32.totalorder %v54, 0
    %vm57 = vmand %vm56, %vm55
    %v58 = vadd.s32 %v54, 16
    %v59 = vsel %vm57, %v58, %v54
    %vm60 = vcmp.eq.s32.totalorder %v59, 15
    %vm61 = vcmp.eq.s32.totalorder %v59, 0
    %62 = vrot.lane.b32.xlu0 %v42, 1
    %v63 = vpop.permute.xlu0 %62
    %64 = vrot.lane.b32.xlu0 %v43, 1
    %v65 = vpop.permute.xlu0 %64
    %66 = vrot.lane.b32.xlu0 %v42, 113
    %v67 = vpop.permute.xlu0 %66
    %68 = vrot.lane.b32.xlu0 %v43, 113
    %v69 = vpop.permute.xlu0 %68
    %v70 = vsel %vm61, 1, 0
    %vm71 = vcmp.eq.s32.totalorder %v70, 1
    %v72 = vsel %vm71, %v67, %v63
    %v73 = vsel %vm71, %v69, %v65
    %74 = vrot.lane.b32.xlu0 %v44, 1
    %v75 = vpop.permute.xlu0 %74
    %76 = vrot.lane.b32.xlu0 %v45, 1
    %v77 = vpop.permute.xlu0 %76
    %78 = vrot.lane.b32.xlu0 %v44, 113
    %v79 = vpop.permute.xlu0 %78
    %80 = vrot.lane.b32.xlu0 %v45, 113
    %v81 = vpop.permute.xlu0 %80
    %v82 = vsel %vm71, %v79, %v75
    %v83 = vsel %vm71, %v81, %v77
    %s84 = sld [smem:[#allocation2]]
    %s85 = sld [smem:[#allocation4]]
    %v86 = vstv %s84
    %v87 = vmul.f32 %v86, %v72
    %v88 = vmul.f32 %v86, %v73
    %v89 = vstv %s85
    %v90 = vmul.f32 %v89, %v82
    %v91 = vmul.f32 %v89, %v83
    %v92 = vsub.f32 %v87, %v90
    %v93 = vsub.f32 %v88, %v91
    %v94 = vadd.f32 %v92, 0.0
    %v95 = vadd.f32 %v93, 0.0
    %v96 = vmul.f32 %v86, %v82
    %v97 = vmul.f32 %v86, %v83
    %v98 = vmul.f32 %v89, %v72
    %v99 = vmul.f32 %v89, %v73
    %v100 = vadd.f32 %v96, %v98
    %v101 = vadd.f32 %v97, %v99
    %v102 = vadd.f32 %v100, 0.0
    %v103 = vadd.f32 %v101, 0.0
    %s104 = sld [smem:[#allocation2 + $0x1]]
    %s105 = sld [smem:[#allocation4 + $0x1]]
    %v106 = vstv %s104
    %v107 = vmul.f32 %v106, %v72
    %v108 = vmul.f32 %v106, %v73
    %v109 = vstv %s105
    %v110 = vmul.f32 %v109, %v82
    %v111 = vmul.f32 %v109, %v83
    %v112 = vsub.f32 %v107, %v110
    %v113 = vsub.f32 %v108, %v111
    %vm116 = vcmask 1046528
    %v117 = vrot.slane %v112, 1
    %v118 = vrot.slane %v113, 1
    %v119 = vsel %vm116, %v117, %v118
    %v122 = vadd.f32 %v94, %v119
    %v123 = vadd.f32 %v95, %v118
    %v124 = vmul.f32 %v106, %v82
    %v125 = vmul.f32 %v106, %v83
    %v126 = vmul.f32 %v109, %v72
    %v127 = vmul.f32 %v109, %v73
    %v128 = vadd.f32 %v124, %v126
    %v129 = vadd.f32 %v125, %v127
    %v132 = vrot.slane %v128, 1
    %v133 = vrot.slane %v129, 1
    %v134 = vsel %vm116, %v132, %v133
    %v137 = vadd.f32 %v102, %v134
    %v138 = vadd.f32 %v103, %v133
    %s139 = sld [smem:[#allocation2 + $0x2]]
    %s140 = sld [smem:[#allocation4 + $0x2]]
    %v141 = vstv %s139
    %v142 = vmul.f32 %v141, %v72
    %v143 = vmul.f32 %v141, %v73
    %v144 = vstv %s140
    %v145 = vmul.f32 %v144, %v82
    %v146 = vmul.f32 %v144, %v83
    %v147 = vsub.f32 %v142, %v145
    %v148 = vsub.f32 %v143, %v146
    %vm151 = vcmask 1045504
    %v152 = vrot.slane %v147, 2
    %v153 = vrot.slane %v148, 2
    %v154 = vsel %vm151, %v152, %v153
    %v157 = vadd.f32 %v122, %v154
    %v158 = vadd.f32 %v123, %v153
    %v159 = vmul.f32 %v141, %v82
    %v160 = vmul.f32 %v141, %v83
    %v161 = vmul.f32 %v144, %v72
    %v162 = vmul.f32 %v144, %v73
    %v163 = vadd.f32 %v159, %v161
    %v164 = vadd.f32 %v160, %v162
    %v167 = vrot.slane %v163, 2
    %v168 = vrot.slane %v164, 2
    %v169 = vsel %vm151, %v167, %v168
    %v172 = vadd.f32 %v137, %v169
    %v173 = vadd.f32 %v138, %v168
    %s174 = sld [smem:[#allocation2 + $0x3]]
    %s175 = sld [smem:[#allocation4 + $0x3]]
    %v176 = vstv %s174
    %v177 = vmul.f32 %v176, %v42
    %v178 = vmul.f32 %v176, %v43
    %v179 = vstv %s175
    %v180 = vmul.f32 %v179, %v44
    %v181 = vmul.f32 %v179, %v45
    %v182 = vsub.f32 %v177, %v180
    %v183 = vsub.f32 %v178, %v181
    %v184 = vadd.f32 %v157, %v182
    %v185 = vadd.f32 %v158, %v183
    %v186 = vmul.f32 %v176, %v44
    %v187 = vmul.f32 %v176, %v45
    %v188 = vmul.f32 %v179, %v42
    %v189 = vmul.f32 %v179, %v43
    %v190 = vadd.f32 %v186, %v188
    %v191 = vadd.f32 %v187, %v189
    %v192 = vadd.f32 %v172, %v190
    %v193 = vadd.f32 %v173, %v191
    %s194 = sld [smem:[#allocation2 + $0x4]]
    %s195 = sld [smem:[#allocation4 + $0x4]]
    %v196 = vstv %s194
    %v197 = vmul.f32 %v196, %v42
    %v198 = vmul.f32 %v196, %v43
    %v199 = vstv %s195
    %v200 = vmul.f32 %v199, %v44
    %v201 = vmul.f32 %v199, %v45
    %v202 = vsub.f32 %v197, %v200
    %v203 = vsub.f32 %v198, %v201
    %v206 = vrot.slane %v202, 1
    %v207 = vrot.slane %v203, 1
    %v208 = vsel %vm116, %v206, %v207
    %v211 = vadd.f32 %v184, %v208
    %v212 = vadd.f32 %v185, %v207
    %v213 = vmul.f32 %v196, %v44
    %v214 = vmul.f32 %v196, %v45
    %v215 = vmul.f32 %v199, %v42
    %v216 = vmul.f32 %v199, %v43
    %v217 = vadd.f32 %v213, %v215
    %v218 = vadd.f32 %v214, %v216
    %v221 = vrot.slane %v217, 1
    %v222 = vrot.slane %v218, 1
    %v223 = vsel %vm116, %v221, %v222
    %v226 = vadd.f32 %v192, %v223
    %v227 = vadd.f32 %v193, %v222
    %s228 = sld [smem:[#allocation2 + $0x5]]
    %s229 = sld [smem:[#allocation4 + $0x5]]
    %v230 = vstv %s228
    %v231 = vmul.f32 %v230, %v42
    %v232 = vmul.f32 %v230, %v43
    %v233 = vstv %s229
    %v234 = vmul.f32 %v233, %v44
    %v235 = vmul.f32 %v233, %v45
    %v236 = vsub.f32 %v231, %v234
    %v237 = vsub.f32 %v232, %v235
    %v240 = vrot.slane %v236, 2
    %v241 = vrot.slane %v237, 2
    %v242 = vsel %vm151, %v240, %v241
    %v245 = vadd.f32 %v211, %v242
    %v246 = vadd.f32 %v212, %v241
    %v247 = vmul.f32 %v230, %v44
    %v248 = vmul.f32 %v230, %v45
    %v249 = vmul.f32 %v233, %v42
    %v250 = vmul.f32 %v233, %v43
    %v251 = vadd.f32 %v247, %v249
    %v252 = vadd.f32 %v248, %v250
    %v255 = vrot.slane %v251, 2
    %v256 = vrot.slane %v252, 2
    %v257 = vsel %vm151, %v255, %v256
    %v260 = vadd.f32 %v226, %v257
    %v261 = vadd.f32 %v227, %v256
    %262 = vrot.lane.b32.xlu0 %v42, 127
    %v263 = vpop.permute.xlu0 %262
    %264 = vrot.lane.b32.xlu0 %v43, 127
    %v265 = vpop.permute.xlu0 %264
    %266 = vrot.lane.b32.xlu0 %v42, 15
    %v267 = vpop.permute.xlu0 %266
    %268 = vrot.lane.b32.xlu0 %v43, 15
    %v269 = vpop.permute.xlu0 %268
    %v270 = vsel %vm60, 1, 0
    %vm271 = vcmp.eq.s32.totalorder %v270, 1
    %v272 = vsel %vm271, %v267, %v263
    %v273 = vsel %vm271, %v269, %v265
    %274 = vrot.lane.b32.xlu0 %v44, 127
    %v275 = vpop.permute.xlu0 %274
    %276 = vrot.lane.b32.xlu0 %v45, 127
    %v277 = vpop.permute.xlu0 %276
    %278 = vrot.lane.b32.xlu0 %v44, 15
    %v279 = vpop.permute.xlu0 %278
    %280 = vrot.lane.b32.xlu0 %v45, 15
    %v281 = vpop.permute.xlu0 %280
    %v282 = vsel %vm271, %v279, %v275
    %v283 = vsel %vm271, %v281, %v277
    %s284 = sld [smem:[#allocation2 + $0x6]]
    %s285 = sld [smem:[#allocation4 + $0x6]]
    %v286 = vstv %s284
    %v287 = vmul.f32 %v286, %v272
    %v288 = vmul.f32 %v286, %v273
    %v289 = vstv %s285
    %v290 = vmul.f32 %v289, %v282
    %v291 = vmul.f32 %v289, %v283
    %v292 = vsub.f32 %v287, %v290
    %v293 = vsub.f32 %v288, %v291
    %v294 = vadd.f32 %v245, %v292
    %v295 = vadd.f32 %v246, %v293
    %v296 = vmul.f32 %v286, %v282
    %v297 = vmul.f32 %v286, %v283
    %v298 = vmul.f32 %v289, %v272
    %v299 = vmul.f32 %v289, %v273
    %v300 = vadd.f32 %v296, %v298
    %v301 = vadd.f32 %v297, %v299
    %v302 = vadd.f32 %v260, %v300
    %v303 = vadd.f32 %v261, %v301
    %s304 = sld [smem:[#allocation2 + $0x7]]
    %s305 = sld [smem:[#allocation4 + $0x7]]
    %v306 = vstv %s304
    %v307 = vmul.f32 %v306, %v272
    %v308 = vmul.f32 %v306, %v273
    %v309 = vstv %s305
    %v310 = vmul.f32 %v309, %v282
    %v311 = vmul.f32 %v309, %v283
    %v312 = vsub.f32 %v307, %v310
    %v313 = vsub.f32 %v308, %v311
    %v316 = vrot.slane %v312, 1
    %v317 = vrot.slane %v313, 1
    %v318 = vsel %vm116, %v316, %v317
    %v321 = vadd.f32 %v294, %v318
    %v322 = vadd.f32 %v295, %v317
    %v323 = vmul.f32 %v306, %v282
    %v324 = vmul.f32 %v306, %v283
    %v325 = vmul.f32 %v309, %v272
    %v326 = vmul.f32 %v309, %v273
    %v327 = vadd.f32 %v323, %v325
    %v328 = vadd.f32 %v324, %v326
    %v331 = vrot.slane %v327, 1
    %v332 = vrot.slane %v328, 1
    %v333 = vsel %vm116, %v331, %v332
    %v336 = vadd.f32 %v302, %v333
    %v337 = vadd.f32 %v303, %v332
    %s338 = sld [smem:[#allocation2 + $0x8]]
    %s339 = sld [smem:[#allocation4 + $0x8]]
    %v340 = vstv %s338
    %v341 = vmul.f32 %v340, %v272
    %v342 = vmul.f32 %v340, %v273
    %v343 = vstv %s339
    %v344 = vmul.f32 %v343, %v282
    %v345 = vmul.f32 %v343, %v283
    %v346 = vsub.f32 %v341, %v344
    %v347 = vsub.f32 %v342, %v345
    %v350 = vrot.slane %v346, 2
    %v351 = vrot.slane %v347, 2
    %v352 = vsel %vm151, %v350, %v351
    %v355 = vadd.f32 %v321, %v352
    %v356 = vadd.f32 %v322, %v351
    %v357 = vmul.f32 %v340, %v282
    %v358 = vmul.f32 %v340, %v283
    %v359 = vmul.f32 %v343, %v272
    %v360 = vmul.f32 %v343, %v273
    %v361 = vadd.f32 %v357, %v359
    %v362 = vadd.f32 %v358, %v360
    %v365 = vrot.slane %v361, 2
    %v366 = vrot.slane %v362, 2
    %v367 = vsel %vm151, %v365, %v366
    %v370 = vadd.f32 %v336, %v367
    %v371 = vadd.f32 %v337, %v366
    %372 = vst [vmem:[%s4] sm:$0xff] %v355
    %373 = vst [vmem:[%s4 + $0x8] sm:$0x1] %v356
    %s374 = scalar_lea.vmem %s4, 16
    %375 = vst [vmem:[%s374] sm:$0xff] %v370
    %376 = vst [vmem:[%s374 + $0x8] sm:$0x1] %v371
    // Predicated region
    $region26: #{fno2d_forward.2} parent=1 // pred_check
      _
    $region27: #{fno2d_forward.2} parent=1 // pred_check_branch
      %378 = sbr.rel (0) target = $region29
    $region28: #{fno2d_forward.2} parent=1 // pred_region
      _
    $region29: #{fno2d_forward.2} parent=1 // pred_fallthru
      _
    // Predicated region
    $region30: #{fno2d_forward.2} parent=1 // pred_check
      _
    $region31: #{fno2d_forward.2} parent=1 // pred_check_branch
      %380 = sbr.rel (0) target = $region33
    $region32: #{fno2d_forward.2} parent=1 // pred_region
      _
    $region33: #{fno2d_forward.2} parent=1 // pred_fallthru
      _
    %381 = vsyncpa [#allocation3], 1
    %382 = vsyncpa [#allocation5], 1

// kernel: tile.13
$region0: #{tile.13}
  #allocation0 [shape = 's32[1]{0}', space=sflag, size = 0x4, scoped, tag = 'scoped memory for tile.13']
  %s0 = inlined_call_operand.vmem [shape: f32[16], index: 0, kind: input, shape index: {}]
  %s1 = inlined_call_operand.vmem [shape: f32[8,16], index: 1, kind: output, shape index: {}]
  // Predicated region
  $region2: #{tile.13} parent=0 // pred_check
    _
  $region3: #{tile.13} parent=0 // pred_check_branch
    %3 = sbr.rel (0) target = $region5
  $region4: #{tile.13} parent=0 // pred_region
    _
  $region5: #{tile.13} parent=0 // pred_fallthru
    _
  %v4 = vld [vmem:[%s0] ss:$0 sm:$0xff]
  %5 = vst [vmem:[%s1] sm:$0xff] %v4

// kernel: tile.14
$region0: #{tile.14}
  %s0 = inlined_call_operand.vmem [shape: f32[8,16], index: 0, kind: input, shape index: {}]
  %s1 = inlined_call_operand.vmem [shape: f32[1,128], index: 1, kind: output, shape index: {}]
  $region1: #{tile.14} parent=0
    #allocation0 [shape = 'u8[4096]{0}', space=vmem, size = 0x1000, scoped, tag = 'scoped mem for output reshape']
    %v2 = vld [vmem:[%s0] sm:$0x1]
    %vm3 = vcmask 130048
    %4 = vst.msk [vmem:[#allocation0] sm:$0x1] %vm3, %v2
    %s5 = scalar_lea.vmem %s0, 7
    %v6 = vld [vmem:[%s5] sm:$0x1]
    %7 = vrot.lane.b32.xlu0 %v6, 112
    %v8 = vpop.permute.xlu0 %7
    %vm9 = vcmask 1048448
    %10 = vst.msk [vmem:[#allocation0] sm:$0x1] %vm9, %v8
    %s11 = scalar_lea.vmem %s0, 6
    %v12 = vld [vmem:[%s11] sm:$0x1]
    %13 = vrot.lane.b32.xlu0 %v12, 96
    %v14 = vpop.permute.xlu0 %13
    %vm15 = vcmask 917248
    %16 = vst.msk [vmem:[#allocation0] sm:$0x1] %vm15, %v14
    %s17 = scalar_lea.vmem %s0, 5
    %v18 = vld [vmem:[%s17] sm:$0x1]
    %19 = vrot.lane.b32.xlu0 %v18, 80
    %v20 = vpop.permute.xlu0 %19
    %vm21 = vcmask 786048
    %22 = vst.msk [vmem:[#allocation0] sm:$0x1] %vm21, %v20
    %s23 = scalar_lea.vmem %s0, 4
    %v24 = vld [vmem:[%s23] sm:$0x1]
    %25 = vrot.lane.b32.xlu0 %v24, 64
    %v26 = vpop.permute.xlu0 %25
    %vm27 = vcmask 654848
    %28 = vst.msk [vmem:[#allocation0] sm:$0x1] %vm27, %v26
    %s29 = scalar_lea.vmem %s0, 3
    %v30 = vld [vmem:[%s29] sm:$0x1]
    %31 = vrot.lane.b32.xlu0 %v30, 48
    %v32 = vpop.permute.xlu0 %31
    %vm33 = vcmask 523648
    %34 = vst.msk [vmem:[#allocation0] sm:$0x1] %vm33, %v32
    %s35 = scalar_lea.vmem %s0, 2
    %v36 = vld [vmem:[%s35] sm:$0x1]
    %37 = vrot.lane.b32.xlu0 %v36, 32
    %v38 = vpop.permute.xlu0 %37
    %vm39 = vcmask 392448
    %40 = vst.msk [vmem:[#allocation0] sm:$0x1] %vm39, %v38
    %s41 = scalar_lea.vmem %s0, 1
    %v42 = vld [vmem:[%s41] sm:$0x1]
    %43 = vrot.lane.b32.xlu0 %v42, 16
    %v44 = vpop.permute.xlu0 %43
    %vm45 = vcmask 261248
    %46 = vst.msk [vmem:[#allocation0] sm:$0x1] %vm45, %v44
    %s48 = sshllo.u32 0, 1
    %v50 = vld [vmem:[#allocation0] sm:%s48]
    %s51 = sshllo.u32 0, 1
    %52 = vst [vmem:[%s1] sm:%s51] %v50

// kernel: fno2d_forward.3
$region0: #{fno2d_forward.3}
  #allocation0 [shape = 'u32[]', space=smem, size = 0x4, offset = 0x4, fixed_abs, tag = 'smem constant byte address 0x4 - core index']
  #allocation1 [shape = 'u32[144,128]{1,0:T(1,128)}', space=vmem, size = 0x12000, scoped, tag = 'internal scratch']
  %s0 = inlined_call_operand.vmem [shape: f32[16,128], index: 0, kind: input, shape index: {}]
  %s1 = inlined_call_operand.vmem [shape: f32[128,128], index: 1, kind: input, shape index: {}]
  %s2 = inlined_call_operand.vmem [shape: f32[1,128], index: 2, kind: input, shape index: {}]
  %s3 = inlined_call_operand.vmem [shape: f32[128,128], index: 3, kind: input, shape index: {}]
  %s4 = inlined_call_operand.vmem [shape: f32[1,128], index: 4, kind: input, shape index: {}]
  %s5 = inlined_call_operand.vmem [shape: f32[16,128], index: 5, kind: output, shape index: {}]
  %s6 = sld [smem:[#allocation0]]
  $region53: #{fno2d_forward.3} parent=0
    _
  %s8 = ssub.s32 1, %s6
  %s9 = scalar_select 0, %s8, %s6
  loop: start=0, step=1, limit=4
  $region2: #{fno2d_forward.3} parent=0 // loop_pre_header
    _
  $region3: #{fno2d_forward.3} parent=0 // loop_header
    %s11 = sphi 0, %s15
    %p12 = scmp.ge.s32.totalorder %s11, 4
    %s21 = sphi 0, %s23
    %s24 = sphi 0, %s21
    %s25 = sphi 0, %s24
    %s41 = sphi 0, %s25
    %s45 = sphi 0, %s45
    %s47 = sphi 0, %s45
    %s48 = sphi 0, %s47
    %s62 = sphi 0, %s48
    %s66 = sphi 0, %s66
    %s68 = sphi 0, %s66
    %s69 = sphi 0, %s68
    %s83 = sphi 0, %s69
    %s87 = sphi 0, %s87
    %s89 = sphi 0, %s87
    %s90 = sphi 0, %s89
    %s104 = sphi 0, %s90
    %s108 = sphi 0, %s108
    %s110 = sphi 0, %s108
    %s111 = sphi 0, %s110
    %s125 = sphi 0, %s111
    %s131 = sphi 0, %s133
    %s134 = sphi 0, %s131
    %s135 = sphi 0, %s134
    %s151 = sphi 0, %s135
  $region4: #{fno2d_forward.3} parent=0 // loop_header_branch
    %14 = sbr.rel (%p12) target = $region8
  $region5: #{fno2d_forward.3} parent=0 // loop_body
    %s16 = ssub.s32 %s11, 1
    %s17 = ssub.s32 %s11, 2
    %s18 = sadd.s32 %s11, 1
    %s19 = ssub.s32 %s11, %s18
    %p20 = scmp.eq.s32.totalorder %s19, 0
    %s22 = sadd.s32 %s21, 1
    %s23 = scalar_select %p20, %s21, %s22
    %p26 = pneg %p20
    %p27 = scmp.eq.s32.totalorder %s11, 1
    %p28 = por %p26, %p27
    %p29 = scmp.ne.s32.totalorder %s21, %s24
    %p30 = scmp.eq.s32.totalorder %s11, 0
    %p31 = por %p29, %p30
    %p32 = scmp.ne.s32.totalorder %s21, %s24
    %p33 = scmp.eq.s32.totalorder %s16, 1
    %p34 = por %p32, %p33
    %p35 = scmp.ne.s32.totalorder %s24, %s25
    %p36 = scmp.eq.s32.totalorder %s16, 0
    %p37 = por %p35, %p36
    %p38 = scmp.ne.s32.totalorder %s24, %s25
    %p39 = scmp.eq.s32.totalorder %s17, 1
    %p40 = por %p38, %p39
    %p42 = scmp.ne.s32.totalorder %s25, %s41
    %p43 = scmp.eq.s32.totalorder %s17, 0
    %p44 = por %p42, %p43
    %s46 = sadd.s32 %s45, 1
    %p49 = scmp.eq.s32.totalorder %s11, 1
    %p50 = scmp.ne.s32.totalorder %s45, %s47
    %p51 = scmp.eq.s32.totalorder %s11, 0
    %p52 = por %p50, %p51
    %p53 = scmp.ne.s32.totalorder %s45, %s47
    %p54 = scmp.eq.s32.totalorder %s16, 1
    %p55 = por %p53, %p54
    %p56 = scmp.ne.s32.totalorder %s47, %s48
    %p57 = scmp.eq.s32.totalorder %s16, 0
    %p58 = por %p56, %p57
    %p59 = scmp.ne.s32.totalorder %s47, %s48
    %p60 = scmp.eq.s32.totalorder %s17, 1
    %p61 = por %p59, %p60
    %p63 = scmp.ne.s32.totalorder %s48, %s62
    %p64 = scmp.eq.s32.totalorder %s17, 0
    %p65 = por %p63, %p64
    %s67 = sadd.s32 %s66, 1
    %p70 = scmp.eq.s32.totalorder %s11, 1
    %p71 = scmp.ne.s32.totalorder %s66, %s68
    %p72 = scmp.eq.s32.totalorder %s11, 0
    %p73 = por %p71, %p72
    %p74 = scmp.ne.s32.totalorder %s66, %s68
    %p75 = scmp.eq.s32.totalorder %s16, 1
    %p76 = por %p74, %p75
    %p77 = scmp.ne.s32.totalorder %s68, %s69
    %p78 = scmp.eq.s32.totalorder %s16, 0
    %p79 = por %p77, %p78
    %p80 = scmp.ne.s32.totalorder %s68, %s69
    %p81 = scmp.eq.s32.totalorder %s17, 1
    %p82 = por %p80, %p81
    %p84 = scmp.ne.s32.totalorder %s69, %s83
    %p85 = scmp.eq.s32.totalorder %s17, 0
    %p86 = por %p84, %p85
    %s88 = sadd.s32 %s87, 1
    %p91 = scmp.eq.s32.totalorder %s11, 1
    %p92 = scmp.ne.s32.totalorder %s87, %s89
    %p93 = scmp.eq.s32.totalorder %s11, 0
    %p94 = por %p92, %p93
    %p95 = scmp.ne.s32.totalorder %s87, %s89
    %p96 = scmp.eq.s32.totalorder %s16, 1
    %p97 = por %p95, %p96
    %p98 = scmp.ne.s32.totalorder %s89, %s90
    %p99 = scmp.eq.s32.totalorder %s16, 0
    %p100 = por %p98, %p99
    %p101 = scmp.ne.s32.totalorder %s89, %s90
    %p102 = scmp.eq.s32.totalorder %s17, 1
    %p103 = por %p101, %p102
    %p105 = scmp.ne.s32.totalorder %s90, %s104
    %p106 = scmp.eq.s32.totalorder %s17, 0
    %p107 = por %p105, %p106
    %s109 = sadd.s32 %s108, 1
    %p112 = scmp.eq.s32.totalorder %s11, 1
    %p113 = scmp.ne.s32.totalorder %s108, %s110
    %p114 = scmp.eq.s32.totalorder %s11, 0
    %p115 = por %p113, %p114
    %p116 = scmp.ne.s32.totalorder %s108, %s110
    %p117 = scmp.eq.s32.totalorder %s16, 1
    %p118 = por %p116, %p117
    %p119 = scmp.ne.s32.totalorder %s110, %s111
    %p120 = scmp.eq.s32.totalorder %s16, 0
    %p121 = por %p119, %p120
    %p122 = scmp.ne.s32.totalorder %s110, %s111
    %p123 = scmp.eq.s32.totalorder %s17, 1
    %p124 = por %p122, %p123
    %p126 = scmp.ne.s32.totalorder %s111, %s125
    %p127 = scmp.eq.s32.totalorder %s17, 0
    %p128 = por %p126, %p127
    %s129 = ssub.s32 %s11, %s18
    %p130 = scmp.eq.s32.totalorder %s129, 0
    %s132 = sadd.s32 %s131, 1
    %s133 = scalar_select %p130, %s131, %s132
    %p136 = pneg %p130
    %p137 = scmp.eq.s32.totalorder %s11, 1
    %p138 = por %p136, %p137
    %p139 = scmp.ne.s32.totalorder %s131, %s134
    %p140 = scmp.eq.s32.totalorder %s11, 0
    %p141 = por %p139, %p140
    %p142 = scmp.ne.s32.totalorder %s131, %s134
    %p143 = scmp.eq.s32.totalorder %s16, 1
    %p144 = por %p142, %p143
    %p145 = scmp.ne.s32.totalorder %s134, %s135
    %p146 = scmp.eq.s32.totalorder %s16, 0
    %p147 = por %p145, %p146
    %p148 = scmp.ne.s32.totalorder %s134, %s135
    %p149 = scmp.eq.s32.totalorder %s17, 1
    %p150 = por %p148, %p149
    %p152 = scmp.ne.s32.totalorder %s135, %s151
    %p153 = scmp.eq.s32.totalorder %s17, 0
    %p154 = por %p152, %p153
    %p155 = scmp.le.s32.totalorder 1, %s11
    %p156 = scmp.lt.s32.totalorder %s11, 3
    %p157 = pnand %p155, %p156
    %p158 = pneg %p157
    // Predicated region
    $region9: #{fno2d_forward.3} parent=5 // pred_check
      _
    $region10: #{fno2d_forward.3} parent=5 // pred_check_branch
      %160 = sbr.rel (%p157) target = $region12
    $region11: #{fno2d_forward.3} parent=5 // pred_region
      %s161 = ssub.s32 %s11, 1
      // Predicated region
      $region13: #{fno2d_forward.3} parent=11 // pred_check
        %p162 = pneg %p58
      $region14: #{fno2d_forward.3} parent=11 // pred_check_branch
        %164 = sbr.rel (%p162) target = $region16
      $region15: #{fno2d_forward.3} parent=11 // pred_region
        _
      $region16: #{fno2d_forward.3} parent=11 // pred_fallthru
        _
      // Predicated region
      $region17: #{fno2d_forward.3} parent=11 // pred_check
        %p165 = pneg %p79
      $region18: #{fno2d_forward.3} parent=11 // pred_check_branch
        %167 = sbr.rel (%p165) target = $region20
      $region19: #{fno2d_forward.3} parent=11 // pred_region
        _
      $region20: #{fno2d_forward.3} parent=11 // pred_fallthru
        _
      // Predicated region
      $region21: #{fno2d_forward.3} parent=11 // pred_check
        %p168 = pneg %p100
      $region22: #{fno2d_forward.3} parent=11 // pred_check_branch
        %170 = sbr.rel (%p168) target = $region24
      $region23: #{fno2d_forward.3} parent=11 // pred_region
        _
      $region24: #{fno2d_forward.3} parent=11 // pred_fallthru
        _
      // Predicated region
      $region25: #{fno2d_forward.3} parent=11 // pred_check
        %p171 = pneg %p121
      $region26: #{fno2d_forward.3} parent=11 // pred_check_branch
        %173 = sbr.rel (%p171) target = $region28
      $region27: #{fno2d_forward.3} parent=11 // pred_region
        _
      $region28: #{fno2d_forward.3} parent=11 // pred_fallthru
        _
    $region12: #{fno2d_forward.3} parent=5 // pred_fallthru
      _
    %p174 = scmp.lt.s32.totalorder %s11, 2
    // Predicated region
    $region29: #{fno2d_forward.3} parent=5 // pred_check
      %p175 = pneg %p174
    $region30: #{fno2d_forward.3} parent=5 // pred_check_branch
      %177 = sbr.rel (%p175) target = $region32
    $region31: #{fno2d_forward.3} parent=5 // pred_region
      // Predicated region
      $region33: #{fno2d_forward.3} parent=31 // pred_check
        %p178 = pneg %p31
      $region34: #{fno2d_forward.3} parent=31 // pred_check_branch
        %180 = sbr.rel (%p178) target = $region36
      $region35: #{fno2d_forward.3} parent=31 // pred_region
        %p181 = scmp.lt.s32.totalorder %s11, 1
        %s182 = scalar_select %p181, %s11, 1
        %s183 = smul.addr %s182, 8
        %s184 = scalar_lea.vmem %s0, %s183
      $region36: #{fno2d_forward.3} parent=31 // pred_fallthru
        _
    $region32: #{fno2d_forward.3} parent=5 // pred_fallthru
      _
    %p185 = scmp.le.s32.totalorder 1, %s11
    %p186 = scmp.lt.s32.totalorder %s11, 3
    %p187 = pnand %p185, %p186
    %p188 = pneg %p187
    // Predicated region
    $region37: #{fno2d_forward.3} parent=5 // pred_check
      _
    $region38: #{fno2d_forward.3} parent=5 // pred_check_branch
      %190 = sbr.rel (%p187) target = $region40
    $region39: #{fno2d_forward.3} parent=5 // pred_region
      %s191 = ssub.s32 %s11, 1
      %p192 = scmp.lt.s32.totalorder %s16, 1
      %s193 = scalar_select %p192, %s16, 1
      %s194 = smul.addr %s193, 8
      %s195 = scalar_lea.vmem %s0, %s194
      %p196 = pneg %p37
      %p197 = pneg %p34
      %p198 = pneg %p58
      %p199 = pneg %p55
      %p200 = pneg %p79
      %p201 = pneg %p76
      %p202 = pneg %p100
      %p203 = pneg %p97
      %p204 = pneg %p121
      %p205 = pneg %p118
      %p206 = pneg %p147
      %p207 = pneg %p144
      %p208 = scmp.lt.s32.totalorder %s16, 1
      %s209 = scalar_select %p208, %s16, 1
      %s210 = smul.addr %s209, 8
      %s211 = scalar_lea.vmem %s5, %s210
      %p212 = scmp.lt.s32.totalorder %s16, 1
      %s213 = scalar_select %p212, %s16, 1
      %s214 = smul.addr %s213, 8
      %s215 = scalar_lea.vmem %s0, %s214
      %p216 = scmp.lt.s32.totalorder %s16, 1
      %s217 = scalar_select %p216, %s16, 1
      %s218 = smul.addr %s217, 8
      %s219 = scalar_lea.vmem %s5, %s218
      %v220 = vld [vmem:[%s215] sm:$0xff]
      %v221 = vld [vmem:[%s1] sm:$0xff]
      %v222 = vld [vmem:[%s1 + $0x8] sm:$0xff]
      %v223 = vld [vmem:[%s1 + $0x10] sm:$0xff]
      %v224 = vld [vmem:[%s1 + $0x18] sm:$0xff]
      %v225 = vld [vmem:[%s1 + $0x20] sm:$0xff]
      %v226 = vld [vmem:[%s1 + $0x28] sm:$0xff]
      %v227 = vld [vmem:[%s1 + $0x30] sm:$0xff]
      %v228 = vld [vmem:[%s1 + $0x38] sm:$0xff]
      %v229 = vld [vmem:[%s1 + $0x40] sm:$0xff]
      %v230 = vld [vmem:[%s1 + $0x48] sm:$0xff]
      %v231 = vld [vmem:[%s1 + $0x50] sm:$0xff]
      %v232 = vld [vmem:[%s1 + $0x58] sm:$0xff]
      %v233 = vld [vmem:[%s1 + $0x60] sm:$0xff]
      %v234 = vld [vmem:[%s1 + $0x68] sm:$0xff]
      %v235 = vld [vmem:[%s1 + $0x70] sm:$0xff]
      %v236 = vld [vmem:[%s1 + $0x78] sm:$0xff]
      %v237 = vld [vmem:[%s2] sm:$0x1]
      %v239 = vlaneseq
      %v240 = vshrl.u32 %v239, 7
      %v241 = vsub.s32 0, %v240
      %v242 = vrot.slane %v237, %v241
      %244 = vmatprep.subr.mxu0 0.0
      %245 = vmatpush1.msra.mxu0 %v221
      %246 = vmatprep.subr.mxu0 0.0
      %247 = vmatpush1.msra.mxu0 %v222
      %248 = vmatprep.subr.mxu0 0.0
      %249 = vmatpush1.msra.mxu0 %v223
      %250 = vmatprep.subr.mxu0 0.0
      %251 = vmatpush1.msra.mxu0 %v224
      %252 = vmatprep.subr.mxu0 0.0
      %253 = vmatpush1.msra.mxu0 %v225
      %254 = vmatprep.subr.mxu0 0.0
      %255 = vmatpush1.msra.mxu0 %v226
      %256 = vmatprep.subr.mxu0 0.0
      %257 = vmatpush1.msra.mxu0 %v227
      %258 = vmatprep.subr.mxu0 0.0
      %259 = vmatpush1.msra.mxu0 %v228
      %260 = vmatprep.subr.mxu0 0.0
      %261 = vmatpush1.msra.mxu0 %v229
      %262 = vmatprep.subr.mxu0 0.0
      %263 = vmatpush1.msra.mxu0 %v230
      %264 = vmatprep.subr.mxu0 0.0
      %265 = vmatpush1.msra.mxu0 %v231
      %266 = vmatprep.subr.mxu0 0.0
      %267 = vmatpush1.msra.mxu0 %v232
      %268 = vmatprep.subr.mxu0 0.0
      %269 = vmatpush1.msra.mxu0 %v233
      %270 = vmatprep.subr.mxu0 0.0
      %271 = vmatpush1.msra.mxu0 %v234
      %272 = vmatprep.subr.mxu0 0.0
      %273 = vmatpush1.msra.mxu0 %v235
      %274 = vmatprep.subr.mxu0 0.0
      %275 = vmatpush1.msra.mxu0 %v236
      %276 = vmatprep.subr.mxu0 0.0
      %277 = vmatpush1.msra.mxu0 0.0
      %278 = vmatprep.subr.mxu0 0.0
      %279 = vmatpush1.msra.mxu0 0.0
      %280 = vmatprep.subr.mxu0 0.0
      %281 = vmatpush1.msra.mxu0 0.0
      %282 = vmatprep.subr.mxu0 0.0
      %283 = vmatpush1.msra.mxu0 0.0
      %284 = vmatprep.subr.mxu0 0.0
      %285 = vmatpush1.msra.mxu0 0.0
      %286 = vmatprep.subr.mxu0 0.0
      %287 = vmatpush1.msra.mxu0 0.0
      %288 = vmatprep.subr.mxu0 0.0
      %289 = vmatpush1.msra.mxu0 0.0
      %290 = vmatprep.subr.mxu0 0.0
      %291 = vmatpush1.msra.mxu0 0.0
      %292 = vmatprep.subr.mxu0 0.0
      %293 = vmatpush1.msra.mxu0 0.0
      %294 = vmatprep.subr.mxu0 0.0
      %295 = vmatpush1.msra.mxu0 0.0
      %296 = vmatprep.subr.mxu0 0.0
      %297 = vmatpush1.msra.mxu0 0.0
      %298 = vmatprep.subr.mxu0 0.0
      %299 = vmatpush1.msra.mxu0 0.0
      %300 = vmatprep.subr.mxu0 0.0
      %301 = vmatpush1.msra.mxu0 0.0
      %302 = vmatprep.subr.mxu0 0.0
      %303 = vmatpush1.msra.mxu0 0.0
      %304 = vmatprep.subr.mxu0 0.0
      %305 = vmatpush1.msra.mxu0 0.0
      %306 = vmatprep.subr.mxu0 0.0
      %307 = vmatpush1.msra.mxu0 0.0
      %308 = vmatprep.mubr.f32.mxu0 0.0
      %309 = vmatmul.mubr.f32.gmra.mrb[0].mxu0 %v220
      %v310 = vpop.f32.mrb[0].mxu0
      %v311 = vadd.f32 %v242, %v310
      %v312 = vpop.f32.mrb[0].mxu0
      %313 = vdwg.mxu0
      %v314 = vmax.f32 %v311, 0.0
      %v315 = vld [vmem:[%s3] sm:$0xff]
      %v316 = vld [vmem:[%s3 + $0x8] sm:$0xff]
      %v317 = vld [vmem:[%s3 + $0x10] sm:$0xff]
      %v318 = vld [vmem:[%s3 + $0x18] sm:$0xff]
      %v319 = vld [vmem:[%s3 + $0x20] sm:$0xff]
      %v320 = vld [vmem:[%s3 + $0x28] sm:$0xff]
      %v321 = vld [vmem:[%s3 + $0x30] sm:$0xff]
      %v322 = vld [vmem:[%s3 + $0x38] sm:$0xff]
      %v323 = vld [vmem:[%s3 + $0x40] sm:$0xff]
      %v324 = vld [vmem:[%s3 + $0x48] sm:$0xff]
      %v325 = vld [vmem:[%s3 + $0x50] sm:$0xff]
      %v326 = vld [vmem:[%s3 + $0x58] sm:$0xff]
      %v327 = vld [vmem:[%s3 + $0x60] sm:$0xff]
      %v328 = vld [vmem:[%s3 + $0x68] sm:$0xff]
      %v329 = vld [vmem:[%s3 + $0x70] sm:$0xff]
      %v330 = vld [vmem:[%s3 + $0x78] sm:$0xff]
      %v331 = vld [vmem:[%s4] sm:$0x1]
      %v333 = vlaneseq
      %v334 = vshrl.u32 %v333, 7
      %v335 = vsub.s32 0, %v334
      %v336 = vrot.slane %v331, %v335
      %338 = vmatprep.subr.mxu0 0.0
      %339 = vmatpush1.msra.mxu0 %v315
      %340 = vmatprep.subr.mxu0 0.0
      %341 = vmatpush1.msra.mxu0 %v316
      %342 = vmatprep.subr.mxu0 0.0
      %343 = vmatpush1.msra.mxu0 %v317
      %344 = vmatprep.subr.mxu0 0.0
      %345 = vmatpush1.msra.mxu0 %v318
      %346 = vmatprep.subr.mxu0 0.0
      %347 = vmatpush1.msra.mxu0 %v319
      %348 = vmatprep.subr.mxu0 0.0
      %349 = vmatpush1.msra.mxu0 %v320
      %350 = vmatprep.subr.mxu0 0.0
      %351 = vmatpush1.msra.mxu0 %v321
      %352 = vmatprep.subr.mxu0 0.0
      %353 = vmatpush1.msra.mxu0 %v322
      %354 = vmatprep.subr.mxu0 0.0
      %355 = vmatpush1.msra.mxu0 %v323
      %356 = vmatprep.subr.mxu0 0.0
      %357 = vmatpush1.msra.mxu0 %v324
      %358 = vmatprep.subr.mxu0 0.0
      %359 = vmatpush1.msra.mxu0 %v325
      %360 = vmatprep.subr.mxu0 0.0
      %361 = vmatpush1.msra.mxu0 %v326
      %362 = vmatprep.subr.mxu0 0.0
      %363 = vmatpush1.msra.mxu0 %v327
      %364 = vmatprep.subr.mxu0 0.0
      %365 = vmatpush1.msra.mxu0 %v328
      %366 = vmatprep.subr.mxu0 0.0
      %367 = vmatpush1.msra.mxu0 %v329
      %368 = vmatprep.subr.mxu0 0.0
      %369 = vmatpush1.msra.mxu0 %v330
      %370 = vmatprep.subr.mxu0 0.0
      %371 = vmatpush1.msra.mxu0 0.0
      %372 = vmatprep.subr.mxu0 0.0
      %373 = vmatpush1.msra.mxu0 0.0
      %374 = vmatprep.subr.mxu0 0.0
      %375 = vmatpush1.msra.mxu0 0.0
      %376 = vmatprep.subr.mxu0 0.0
      %377 = vmatpush1.msra.mxu0 0.0
      %378 = vmatprep.subr.mxu0 0.0
      %379 = vmatpush1.msra.mxu0 0.0
      %380 = vmatprep.subr.mxu0 0.0
      %381 = vmatpush1.msra.mxu0 0.0
      %382 = vmatprep.subr.mxu0 0.0
      %383 = vmatpush1.msra.mxu0 0.0
      %384 = vmatprep.subr.mxu0 0.0
      %385 = vmatpush1.msra.mxu0 0.0
      %386 = vmatprep.subr.mxu0 0.0
      %387 = vmatpush1.msra.mxu0 0.0
      %388 = vmatprep.subr.mxu0 0.0
      %389 = vmatpush1.msra.mxu0 0.0
      %390 = vmatprep.subr.mxu0 0.0
      %391 = vmatpush1.msra.mxu0 0.0
      %392 = vmatprep.subr.mxu0 0.0
      %393 = vmatpush1.msra.mxu0 0.0
      %394 = vmatprep.subr.mxu0 0.0
      %395 = vmatpush1.msra.mxu0 0.0
      %396 = vmatprep.subr.mxu0 0.0
      %397 = vmatpush1.msra.mxu0 0.0
      %398 = vmatprep.subr.mxu0 0.0
      %399 = vmatpush1.msra.mxu0 0.0
      %400 = vmatprep.subr.mxu0 0.0
      %401 = vmatpush1.msra.mxu0 0.0
      %402 = vmatprep.mubr.f32.mxu0 0.0
      %403 = vmatmul.mubr.f32.gmra.mrb[0].mxu0 %v314
      %v404 = vpop.f32.mrb[0].mxu0
      %v405 = vadd.f32 %v336, %v404
      %v406 = vpop.f32.mrb[0].mxu0
      %407 = vdwg.mxu0
      %408 = vst [vmem:[%s219] sm:$0xff] %v405
      %p409 = scmp.lt.s32.totalorder %s16, 1
      %s410 = scalar_select %p409, %s16, 1
      %s411 = smul.addr %s410, 8
      %s412 = scalar_lea.vmem %s5, %s411
      // Predicated region
      $region41: #{fno2d_forward.3} parent=39 // pred_check
        %p413 = pneg %p144
      $region42: #{fno2d_forward.3} parent=39 // pred_check_branch
        %415 = sbr.rel (%p413) target = $region44
      $region43: #{fno2d_forward.3} parent=39 // pred_region
        _
      $region44: #{fno2d_forward.3} parent=39 // pred_fallthru
        _
    $region40: #{fno2d_forward.3} parent=5 // pred_fallthru
      _
    %p416 = scmp.le.s32.totalorder 2, %s11
    // Predicated region
    $region45: #{fno2d_forward.3} parent=5 // pred_check
      %p417 = pneg %p416
    $region46: #{fno2d_forward.3} parent=5 // pred_check_branch
      %419 = sbr.rel (%p417) target = $region48
    $region47: #{fno2d_forward.3} parent=5 // pred_region
      %s420 = ssub.s32 %s11, 2
      // Predicated region
      $region49: #{fno2d_forward.3} parent=47 // pred_check
        %p421 = pneg %p150
      $region50: #{fno2d_forward.3} parent=47 // pred_check_branch
        %423 = sbr.rel (%p421) target = $region52
      $region51: #{fno2d_forward.3} parent=47 // pred_region
        %p424 = scmp.lt.s32.totalorder %s17, 1
        %s425 = scalar_select %p424, %s17, 1
        %s426 = smul.addr %s425, 8
        %s427 = scalar_lea.vmem %s5, %s426
      $region52: #{fno2d_forward.3} parent=47 // pred_fallthru
        _
    $region48: #{fno2d_forward.3} parent=5 // pred_fallthru
      _
  $region6: #{fno2d_forward.3} parent=0 // loop_footer
    %s15 = sadd.s32 1, %s11
  $region7: #{fno2d_forward.3} parent=0 // loop_footer_branch
    %10 = sbr.rel target = $region3
  $region8: #{fno2d_forward.3} parent=0 // loop_exit
    _

</llo_original>
